<compile_context>
chip_gen: v7x
topology: tpu7x:2x2x1
jax: 0.10.0
libtpu: 0.0.40
codegen_flags: <defaults>
</compile_context>

<pallas_src>
import functools

import jax
import jax.numpy as jnp
from jax import lax
from jax.experimental import pallas as pl
from jax.experimental.pallas import tpu as pltpu


# ----------------------------------------------------------------------------
# Pallas kernel: fused transposed matmul + bias + optional ReLU
#   o_ref[N, TM] = act( w_ref[N, K] @ at_ref[K, TM] + b_ref[N, 1] )
# ----------------------------------------------------------------------------
def _gemm_t_kernel(w_ref, at_ref, b_ref, o_ref, *, apply_relu):
    acc = jnp.dot(w_ref[...], at_ref[...], preferred_element_type=jnp.float32)
    acc = acc + b_ref[...]                      # (N, 1) broadcasts over lanes
    if apply_relu:
        acc = jnp.maximum(acc, 0.0)
    o_ref[...] = acc.astype(o_ref.dtype)


def matmul_bias_t(w, at, b, *, apply_relu, out_dtype=jnp.bfloat16, tm_max=512):
    """w: (N, K) bf16, at: (K, M) bf16, b: (N,) f32 -> (N, M) out_dtype.

    M (= B*Ho*Wo) is the lane-dense minor axis, tiled with a "parallel" grid;
    N and K stay whole (N <= 64 channels, K <= a few thousand).
    """
    N, K = w.shape
    K2, M = at.shape
    assert K == K2, (K, K2)

    if M < 128:
        tm = M                                   # full-extent block (lane dim == array dim)
    else:
        tm = min(tm_max, (M // 128) * 128)       # multiple of 128 lanes
    grid_m = pl.cdiv(M, tm)

    out_isize = jnp.dtype(out_dtype).itemsize
    # Double-buffered activation/output tiles + resident weights + bias, with margin.
    est = 2 * (K * tm * 2) + 2 * (N * K * 2) + 2 * (N * tm * out_isize) + 2 * (N * 4)
    vmem_limit = int(min(max(4 * est, 32 * 1024 * 1024), 64 * 1024 * 1024))

    cost = pl.CostEstimate(
        flops=2 * M * K * N,
        transcendentals=0,
        bytes_accessed=int(K * M * 2 + N * K * 2 + N * 4 + N * M * out_isize),
    )

    return pl.pallas_call(
        functools.partial(_gemm_t_kernel, apply_relu=apply_relu),
        out_shape=jax.ShapeDtypeStruct((N, M), out_dtype),
        grid=(grid_m,),
        in_specs=[
            pl.BlockSpec((N, K), lambda i: (0, 0)),    # weights: resident across M tiles
            pl.BlockSpec((K, tm), lambda i: (0, i)),   # activation tile (lane-dense)
            pl.BlockSpec((N, 1), lambda i: (0, 0)),    # bias: resident
        ],
        out_specs=pl.BlockSpec((N, tm), lambda i: (0, i)),
        compiler_params=pltpu.CompilerParams(
            dimension_semantics=("parallel",),
            vmem_limit_bytes=vmem_limit,
        ),
        cost_estimate=cost,
    )(w, at, b.reshape(N, 1).astype(jnp.float32))


# ----------------------------------------------------------------------------
# Plain-JAX glue: transposed im2col.  patches^T is (kh*kw*C, B*Ho*Wo) in bf16,
# with the K axis ordered (kh, kw, cin) to match the prepared conv weights.
# ----------------------------------------------------------------------------
def im2col_t(y_cbhw, kh, kw, stride):
    y = y_cbhw.astype(jnp.bfloat16)
    C, B, H, W = y.shape
    Ho = (H - kh) // stride + 1
    Wo = (W - kw) // stride + 1
    taps = []
    for i in range(kh):
        for j in range(kw):
            taps.append(y[:, :, i:i + stride * Ho:stride, j:j + stride * Wo:stride])
    p = jnp.stack(taps, axis=0)                  # (kh*kw, C, B, Ho, Wo)
    # TODO(synk): fuse patch extraction into the Pallas kernel (manual DMA over
    # overlapping windows) to remove the HBM round trip of the patch matrix
    # (~4x inflation for the 8x8/s4 conv1).
    return p.reshape(kh * kw * C, B * Ho * Wo), Ho, Wo


# ----------------------------------------------------------------------------
# One-time parameter preparation: PyTorch layout -> kernel layout (bf16).
# ----------------------------------------------------------------------------
def prepare_params(params):
    def conv_w(w_oihw):  # (O, I, kh, kw) -> (O, kh*kw*I), K ordered (kh, kw, I)
        o, i, kh, kw = w_oihw.shape
        return jnp.transpose(w_oihw, (0, 2, 3, 1)).reshape(o, kh * kw * i).astype(jnp.bfloat16)

    return {
        "w1": conv_w(params["conv1_w"]), "b1": params["conv1_b"].astype(jnp.float32),
        "w2": conv_w(params["conv2_w"]), "b2": params["conv2_b"].astype(jnp.float32),
        "w3": conv_w(params["conv3_w"]), "b3": params["conv3_b"].astype(jnp.float32),
        # PyTorch fc weight (out, in) is already the (N, K) operand we need.
        "wf": params["fc_w"].astype(jnp.bfloat16),
        "bf": params["fc_b"].astype(jnp.float32),
    }


# ----------------------------------------------------------------------------
# DQN forward:  Conv(c,32,8,4)+ReLU -> Conv(32,64,4,2)+ReLU -> Conv(64,64,3,1)
#               -> Flatten(C,H,W order) -> Linear(flat, out)+ReLU
# ----------------------------------------------------------------------------
def dqn_forward(prepared, obs_nchw, state=None):
    p = prepared
    B = obs_nchw.shape[0]
    x = jnp.transpose(obs_nchw.astype(jnp.float32), (1, 0, 2, 3))    # (C, B, H, W)

    # TODO(synk): for the small-batch RL-inference regime, fuse all four layers
    # into a single pallas_call (weights resident in VMEM, intermediates in
    # VMEM scratch) to remove the remaining per-layer launch + HBM round trips.
    a1, h1, w1 = im2col_t(x, 8, 8, 4)
    y1 = matmul_bias_t(p["w1"], a1, p["b1"], apply_relu=True).reshape(32, B, h1, w1)

    a2, h2, w2 = im2col_t(y1, 4, 4, 2)
    y2 = matmul_bias_t(p["w2"], a2, p["b2"], apply_relu=True).reshape(64, B, h2, w2)

    a3, h3, w3 = im2col_t(y2, 3, 3, 1)
    y3 = matmul_bias_t(p["w3"], a3, p["b3"], apply_relu=False).reshape(64, B, h3, w3)

    # Flatten in PyTorch (C, H, W) order, kept transposed: (flat_dim, B).
    feat_t = jnp.transpose(y3, (0, 2, 3, 1)).reshape(64 * h3 * w3, B)
    logits_t = matmul_bias_t(p["wf"], feat_t, p["bf"], apply_relu=True,
                             out_dtype=jnp.float32)
    return logits_t.T, state


# ----------------------------------------------------------------------------
# Init (PyTorch-layout params) + pure-JAX float32 reference for validation
# ----------------------------------------------------------------------------
def conv_out(size, k, s):
    return (size - k) // s + 1


def init_params(key, c, h, w, output_size):
    h1, w1 = conv_out(h, 8, 4), conv_out(w, 8, 4)
    h2, w2 = conv_out(h1, 4, 2), conv_out(w1, 4, 2)
    h3, w3 = conv_out(h2, 3, 1), conv_out(w2, 3, 1)
    flat_dim = 64 * h3 * w3

    ks = jax.random.split(key, 8)

    def winit(k, shape, fan_in):
        return jax.random.normal(k, shape, jnp.float32) * (1.0 / jnp.sqrt(fan_in))

    params = {
        "conv1_w": winit(ks[0], (32, c, 8, 8), c * 8 * 8),
        "conv1_b": winit(ks[1], (32,), c * 8 * 8),
        "conv2_w": winit(ks[2], (64, 32, 4, 4), 32 * 4 * 4),
        "conv2_b": winit(ks[3], (64,), 32 * 4 * 4),
        "conv3_w": winit(ks[4], (64, 64, 3, 3), 64 * 3 * 3),
        "conv3_b": winit(ks[5], (64,), 64 * 3 * 3),
        "fc_w": winit(ks[6], (output_size, flat_dim), flat_dim),
        "fc_b": winit(ks[7], (output_size,), flat_dim),
    }
    return params, flat_dim


def dqn_reference(params, obs):
    def conv(x, w, b, s):
        y = lax.conv_general_dilated(x, w, (s, s), "VALID",
                                     dimension_numbers=("NCHW", "OIHW", "NCHW"))
        return y + b[None, :, None, None]

    x = obs.astype(jnp.float32)
    x = jax.nn.relu(conv(x, params["conv1_w"], params["conv1_b"], 4))
    x = jax.nn.relu(conv(x, params["conv2_w"], params["conv2_b"], 2))
    x = conv(x, params["conv3_w"], params["conv3_b"], 1)
    feat = x.reshape(x.shape[0], -1)
    return jax.nn.relu(feat @ params["fc_w"].T + params["fc_b"])


if __name__ == "__main__":
    # 36x36 is the minimum spatial size the conv stack accepts
    # ((36-8)/4+1=8 -> (8-4)/2+1=3 -> 3-2=1), giving flat_dim = 64.
    B, C, H, W = 2, 4, 36, 36
    OUTPUT_SIZE = 8

    key = jax.random.PRNGKey(0)
    pkey, okey = jax.random.split(key)
    params, flat_dim = init_params(pkey, C, H, W, OUTPUT_SIZE)
    prepared = prepare_params(params)
    obs = jax.random.normal(okey, (B, C, H, W), jnp.float32)

    logits, state = jax.jit(dqn_forward)(prepared, obs)
    logits = jax.block_until_ready(logits)

    assert logits.shape == (B, OUTPUT_SIZE), logits.shape
    assert logits.dtype == jnp.float32
    assert bool(jnp.all(logits >= 0.0))          # final ReLU
    assert state is None

    # Numerical check vs. float32 reference (kernels use bf16 MXU inputs).
    ref = dqn_reference(params, obs)
    max_err = float(jnp.max(jnp.abs(logits - ref)))
    assert max_err < 1e-1, max_err

    print("KERNEL_OK")
</pallas_src>

<mosaic_0001>
module attributes {stable_mosaic.version = 11 : i64} {
  func.func @_gemm_t_kernel(%arg0: i32, %arg1: memref<32x256xbf16, #tpu.memory_space<vmem>>, %arg2: memref<256x128xbf16, #tpu.memory_space<vmem>>, %arg3: memref<32x1xf32, #tpu.memory_space<vmem>>, %arg4: memref<32x128xbf16, #tpu.memory_space<vmem>>) attributes {dimension_semantics = [#tpu.dimension_semantics<parallel>], iteration_bounds = array<i64: 1>, scalar_prefetch = 0 : i64, scratch_operands = 0 : i64, tpu.core_type = #tpu.core_type<tc>, window_params = [{pipeline_mode = #tpu.pipeline_mode<synchronous>, transform_indices = @transform_0, window_bounds = array<i64: 32, 256>}, {transform_indices = @transform_1, window_bounds = array<i64: 256, 128>}, {pipeline_mode = #tpu.pipeline_mode<synchronous>, transform_indices = @transform_2, window_bounds = array<i64: 32, 1>}, {transform_indices = @transform_3, window_bounds = array<i64: 32, 128>}]} {
    %c0 = arith.constant 0 : index
    %c0_0 = arith.constant 0 : index
    %0 = vector.load %arg1[%c0, %c0_0] : memref<32x256xbf16, #tpu.memory_space<vmem>>, vector<32x256xbf16>
    %c0_1 = arith.constant 0 : index
    %c0_2 = arith.constant 0 : index
    %1 = vector.load %arg2[%c0_1, %c0_2] : memref<256x128xbf16, #tpu.memory_space<vmem>>, vector<256x128xbf16>
    %cst = arith.constant dense<0.000000e+00> : vector<32x128xf32>
    %2 = tpu.matmul %0, %1, %cst {dimension_numbers = #tpu.dot_dimension_numbers<[1], [0], [0], [1], [0, 0, 1, 1], [], []>} : vector<32x256xbf16>, vector<256x128xbf16>, vector<32x128xf32> -> vector<32x128xf32>
    %c0_3 = arith.constant 0 : index
    %c0_4 = arith.constant 0 : index
    %3 = vector.load %arg3[%c0_3, %c0_4] : memref<32x1xf32, #tpu.memory_space<vmem>>, vector<32x1xf32>
    %4 = vector.broadcast %3 : vector<32x1xf32> to vector<32x128xf32>
    %5 = arith.addf %2, %4 : vector<32x128xf32>
    %cst_5 = arith.constant 0.000000e+00 : f32
    %6 = vector.broadcast %cst_5 : f32 to vector<32x128xf32>
    %7 = arith.maximumf %5, %6 : vector<32x128xf32>
    %8 = arith.truncf %7 : vector<32x128xf32> to vector<32x128xbf16>
    %c0_6 = arith.constant 0 : index
    %c0_7 = arith.constant 0 : index
    %9 = vector.load %arg4[%c0_6, %c0_7] : memref<32x128xbf16, #tpu.memory_space<vmem>>, vector<32x128xbf16>
    tpu.vector_store %arg4[%c0_6, %c0_7], %8 {strides = array<i32>} : memref<32x128xbf16, #tpu.memory_space<vmem>>, vector<32x128xbf16>,
    return
  }
  func.func @transform_0(%arg0: i32) -> (i32, i32) {
    %c0_i32 = arith.constant 0 : i32
    %c0_i32_0 = arith.constant 0 : i32
    %c0_i32_1 = arith.constant 0 : i32
    return %c0_i32, %c0_i32_0 : i32, i32
  }
  func.func @transform_1(%arg0: i32) -> (i32, i32) {
    %c0_i32 = arith.constant 0 : i32
    %c0_i32_0 = arith.constant 0 : i32
    return %c0_i32, %arg0 : i32, i32
  }
  func.func @transform_2(%arg0: i32) -> (i32, i32) {
    %c0_i32 = arith.constant 0 : i32
    %c0_i32_0 = arith.constant 0 : i32
    %c0_i32_1 = arith.constant 0 : i32
    return %c0_i32, %c0_i32_0 : i32, i32
  }
  func.func @transform_3(%arg0: i32) -> (i32, i32) {
    %c0_i32 = arith.constant 0 : i32
    %c0_i32_0 = arith.constant 0 : i32
    return %c0_i32, %arg0 : i32, i32
  }
}

module attributes {stable_mosaic.version = 11 : i64} {
  func.func @_gemm_t_kernel(%arg0: i32, %arg1: memref<64x512xbf16, #tpu.memory_space<vmem>>, %arg2: memref<512x18xbf16, #tpu.memory_space<vmem>>, %arg3: memref<64x1xf32, #tpu.memory_space<vmem>>, %arg4: memref<64x18xbf16, #tpu.memory_space<vmem>>) attributes {dimension_semantics = [#tpu.dimension_semantics<parallel>], iteration_bounds = array<i64: 1>, scalar_prefetch = 0 : i64, scratch_operands = 0 : i64, tpu.core_type = #tpu.core_type<tc>, window_params = [{pipeline_mode = #tpu.pipeline_mode<synchronous>, transform_indices = @transform_0, window_bounds = array<i64: 64, 512>}, {transform_indices = @transform_1, window_bounds = array<i64: 512, 18>}, {pipeline_mode = #tpu.pipeline_mode<synchronous>, transform_indices = @transform_2, window_bounds = array<i64: 64, 1>}, {transform_indices = @transform_3, window_bounds = array<i64: 64, 18>}]} {
    %c0 = arith.constant 0 : index
    %c0_0 = arith.constant 0 : index
    %0 = vector.load %arg1[%c0, %c0_0] : memref<64x512xbf16, #tpu.memory_space<vmem>>, vector<64x512xbf16>
    %c0_1 = arith.constant 0 : index
    %c0_2 = arith.constant 0 : index
    %1 = vector.load %arg2[%c0_1, %c0_2] : memref<512x18xbf16, #tpu.memory_space<vmem>>, vector<512x18xbf16>
    %cst = arith.constant dense<0.000000e+00> : vector<64x18xf32>
    %2 = tpu.matmul %0, %1, %cst {dimension_numbers = #tpu.dot_dimension_numbers<[1], [0], [0], [1], [0, 0, 1, 1], [], []>} : vector<64x512xbf16>, vector<512x18xbf16>, vector<64x18xf32> -> vector<64x18xf32>
    %c0_3 = arith.constant 0 : index
    %c0_4 = arith.constant 0 : index
    %3 = vector.load %arg3[%c0_3, %c0_4] : memref<64x1xf32, #tpu.memory_space<vmem>>, vector<64x1xf32>
    %4 = vector.broadcast %3 : vector<64x1xf32> to vector<64x18xf32>
    %5 = arith.addf %2, %4 : vector<64x18xf32>
    %cst_5 = arith.constant 0.000000e+00 : f32
    %6 = vector.broadcast %cst_5 : f32 to vector<64x18xf32>
    %7 = arith.maximumf %5, %6 : vector<64x18xf32>
    %8 = arith.truncf %7 : vector<64x18xf32> to vector<64x18xbf16>
    %c0_6 = arith.constant 0 : index
    %c0_7 = arith.constant 0 : index
    %9 = vector.load %arg4[%c0_6, %c0_7] : memref<64x18xbf16, #tpu.memory_space<vmem>>, vector<64x18xbf16>
    tpu.vector_store %arg4[%c0_6, %c0_7], %8 {strides = array<i32>} : memref<64x18xbf16, #tpu.memory_space<vmem>>, vector<64x18xbf16>,
    return
  }
  func.func @transform_0(%arg0: i32) -> (i32, i32) {
    %c0_i32 = arith.constant 0 : i32
    %c0_i32_0 = arith.constant 0 : i32
    %c0_i32_1 = arith.constant 0 : i32
    return %c0_i32, %c0_i32_0 : i32, i32
  }
  func.func @transform_1(%arg0: i32) -> (i32, i32) {
    %c0_i32 = arith.constant 0 : i32
    %c0_i32_0 = arith.constant 0 : i32
    return %c0_i32, %arg0 : i32, i32
  }
  func.func @transform_2(%arg0: i32) -> (i32, i32) {
    %c0_i32 = arith.constant 0 : i32
    %c0_i32_0 = arith.constant 0 : i32
    %c0_i32_1 = arith.constant 0 : i32
    return %c0_i32, %c0_i32_0 : i32, i32
  }
  func.func @transform_3(%arg0: i32) -> (i32, i32) {
    %c0_i32 = arith.constant 0 : i32
    %c0_i32_0 = arith.constant 0 : i32
    return %c0_i32, %arg0 : i32, i32
  }
}

module attributes {stable_mosaic.version = 11 : i64} {
  func.func @_gemm_t_kernel(%arg0: i32, %arg1: memref<64x576xbf16, #tpu.memory_space<vmem>>, %arg2: memref<576x2xbf16, #tpu.memory_space<vmem>>, %arg3: memref<64x1xf32, #tpu.memory_space<vmem>>, %arg4: memref<64x2xbf16, #tpu.memory_space<vmem>>) attributes {dimension_semantics = [#tpu.dimension_semantics<parallel>], iteration_bounds = array<i64: 1>, scalar_prefetch = 0 : i64, scratch_operands = 0 : i64, tpu.core_type = #tpu.core_type<tc>, window_params = [{pipeline_mode = #tpu.pipeline_mode<synchronous>, transform_indices = @transform_0, window_bounds = array<i64: 64, 576>}, {transform_indices = @transform_1, window_bounds = array<i64: 576, 2>}, {pipeline_mode = #tpu.pipeline_mode<synchronous>, transform_indices = @transform_2, window_bounds = array<i64: 64, 1>}, {transform_indices = @transform_3, window_bounds = array<i64: 64, 2>}]} {
    %c0 = arith.constant 0 : index
    %c0_0 = arith.constant 0 : index
    %0 = vector.load %arg1[%c0, %c0_0] : memref<64x576xbf16, #tpu.memory_space<vmem>>, vector<64x576xbf16>
    %c0_1 = arith.constant 0 : index
    %c0_2 = arith.constant 0 : index
    %1 = vector.load %arg2[%c0_1, %c0_2] : memref<576x2xbf16, #tpu.memory_space<vmem>>, vector<576x2xbf16>
    %cst = arith.constant dense<0.000000e+00> : vector<64x2xf32>
    %2 = tpu.matmul %0, %1, %cst {dimension_numbers = #tpu.dot_dimension_numbers<[1], [0], [0], [1], [0, 0, 1, 1], [], []>} : vector<64x576xbf16>, vector<576x2xbf16>, vector<64x2xf32> -> vector<64x2xf32>
    %c0_3 = arith.constant 0 : index
    %c0_4 = arith.constant 0 : index
    %3 = vector.load %arg3[%c0_3, %c0_4] : memref<64x1xf32, #tpu.memory_space<vmem>>, vector<64x1xf32>
    %4 = vector.broadcast %3 : vector<64x1xf32> to vector<64x2xf32>
    %5 = arith.addf %2, %4 : vector<64x2xf32>
    %6 = arith.truncf %5 : vector<64x2xf32> to vector<64x2xbf16>
    %c0_5 = arith.constant 0 : index
    %c0_6 = arith.constant 0 : index
    %7 = vector.load %arg4[%c0_5, %c0_6] : memref<64x2xbf16, #tpu.memory_space<vmem>>, vector<64x2xbf16>
    tpu.vector_store %arg4[%c0_5, %c0_6], %6 {strides = array<i32>} : memref<64x2xbf16, #tpu.memory_space<vmem>>, vector<64x2xbf16>,
    return
  }
  func.func @transform_0(%arg0: i32) -> (i32, i32) {
    %c0_i32 = arith.constant 0 : i32
    %c0_i32_0 = arith.constant 0 : i32
    %c0_i32_1 = arith.constant 0 : i32
    return %c0_i32, %c0_i32_0 : i32, i32
  }
  func.func @transform_1(%arg0: i32) -> (i32, i32) {
    %c0_i32 = arith.constant 0 : i32
    %c0_i32_0 = arith.constant 0 : i32
    return %c0_i32, %arg0 : i32, i32
  }
  func.func @transform_2(%arg0: i32) -> (i32, i32) {
    %c0_i32 = arith.constant 0 : i32
    %c0_i32_0 = arith.constant 0 : i32
    %c0_i32_1 = arith.constant 0 : i32
    return %c0_i32, %c0_i32_0 : i32, i32
  }
  func.func @transform_3(%arg0: i32) -> (i32, i32) {
    %c0_i32 = arith.constant 0 : i32
    %c0_i32_0 = arith.constant 0 : i32
    return %c0_i32, %arg0 : i32, i32
  }
}

module attributes {stable_mosaic.version = 11 : i64} {
  func.func @_gemm_t_kernel(%arg0: i32, %arg1: memref<8x64xbf16, #tpu.memory_space<vmem>>, %arg2: memref<64x2xbf16, #tpu.memory_space<vmem>>, %arg3: memref<8x1xf32, #tpu.memory_space<vmem>>, %arg4: memref<8x2xf32, #tpu.memory_space<vmem>>) attributes {dimension_semantics = [#tpu.dimension_semantics<parallel>], iteration_bounds = array<i64: 1>, scalar_prefetch = 0 : i64, scratch_operands = 0 : i64, tpu.core_type = #tpu.core_type<tc>, window_params = [{pipeline_mode = #tpu.pipeline_mode<synchronous>, transform_indices = @transform_0, window_bounds = array<i64: 8, 64>}, {transform_indices = @transform_1, window_bounds = array<i64: 64, 2>}, {pipeline_mode = #tpu.pipeline_mode<synchronous>, transform_indices = @transform_2, window_bounds = array<i64: 8, 1>}, {transform_indices = @transform_3, window_bounds = array<i64: 8, 2>}]} {
    %c0 = arith.constant 0 : index
    %c0_0 = arith.constant 0 : index
    %0 = vector.load %arg1[%c0, %c0_0] : memref<8x64xbf16, #tpu.memory_space<vmem>>, vector<8x64xbf16>
    %c0_1 = arith.constant 0 : index
    %c0_2 = arith.constant 0 : index
    %1 = vector.load %arg2[%c0_1, %c0_2] : memref<64x2xbf16, #tpu.memory_space<vmem>>, vector<64x2xbf16>
    %cst = arith.constant dense<0.000000e+00> : vector<8x2xf32>
    %2 = tpu.matmul %0, %1, %cst {dimension_numbers = #tpu.dot_dimension_numbers<[1], [0], [0], [1], [0, 0, 1, 1], [], []>} : vector<8x64xbf16>, vector<64x2xbf16>, vector<8x2xf32> -> vector<8x2xf32>
    %c0_3 = arith.constant 0 : index
    %c0_4 = arith.constant 0 : index
    %3 = vector.load %arg3[%c0_3, %c0_4] : memref<8x1xf32, #tpu.memory_space<vmem>>, vector<8x1xf32>
    %4 = vector.broadcast %3 : vector<8x1xf32> to vector<8x2xf32>
    %5 = arith.addf %2, %4 : vector<8x2xf32>
    %cst_5 = arith.constant 0.000000e+00 : f32
    %6 = vector.broadcast %cst_5 : f32 to vector<8x2xf32>
    %7 = arith.maximumf %5, %6 : vector<8x2xf32>
    %c0_6 = arith.constant 0 : index
    %c0_7 = arith.constant 0 : index
    %8 = vector.load %arg4[%c0_6, %c0_7] : memref<8x2xf32, #tpu.memory_space<vmem>>, vector<8x2xf32>
    tpu.vector_store %arg4[%c0_6, %c0_7], %7 {strides = array<i32>} : memref<8x2xf32, #tpu.memory_space<vmem>>, vector<8x2xf32>,
    return
  }
  func.func @transform_0(%arg0: i32) -> (i32, i32) {
    %c0_i32 = arith.constant 0 : i32
    %c0_i32_0 = arith.constant 0 : i32
    %c0_i32_1 = arith.constant 0 : i32
    return %c0_i32, %c0_i32_0 : i32, i32
  }
  func.func @transform_1(%arg0: i32) -> (i32, i32) {
    %c0_i32 = arith.constant 0 : i32
    %c0_i32_0 = arith.constant 0 : i32
    return %c0_i32, %arg0 : i32, i32
  }
  func.func @transform_2(%arg0: i32) -> (i32, i32) {
    %c0_i32 = arith.constant 0 : i32
    %c0_i32_0 = arith.constant 0 : i32
    %c0_i32_1 = arith.constant 0 : i32
    return %c0_i32, %c0_i32_0 : i32, i32
  }
  func.func @transform_3(%arg0: i32) -> (i32, i32) {
    %c0_i32 = arith.constant 0 : i32
    %c0_i32_0 = arith.constant 0 : i32
    return %c0_i32, %arg0 : i32, i32
  }
}

</mosaic_0001>

<llo_original>
// kernel: dqn_forward.4
$region0: #{dqn_forward.4}
  #allocation0 [shape = 'u32[]', space=smem, size = 0x4, offset = 0x4, fixed_abs, tag = 'smem constant byte address 0x4 - core index']
  #allocation1 [shape = 'u32[144,128]{1,0:T(1,128)}', space=vmem, size = 0x12000, scoped, tag = 'internal scratch']
  %s0 = inlined_call_operand.vmem [shape: bf16[32,256], index: 0, kind: input, shape index: {}]
  %s1 = inlined_call_operand.vmem [shape: bf16[256,128], index: 1, kind: input, shape index: {}]
  %s2 = inlined_call_operand.vmem [shape: f32[32,1], index: 2, kind: input, shape index: {}]
  %s3 = inlined_call_operand.vmem [shape: bf16[32,128], index: 3, kind: output, shape index: {}]
  %s4 = sld [smem:[#allocation0]]
  $region22: #{dqn_forward.4} parent=0
    _
  %s6 = ssub.s32 1, %s4
  %s7 = scalar_select 0, %s6, %s4
  // Predicated region
  $region2: #{dqn_forward.4} parent=0 // pred_check
    _
  $region3: #{dqn_forward.4} parent=0 // pred_check_branch
    %9 = sbr.rel (0) target = $region5
  $region4: #{dqn_forward.4} parent=0 // pred_region
    _
  $region5: #{dqn_forward.4} parent=0 // pred_fallthru
    _
  // Predicated region
  $region6: #{dqn_forward.4} parent=0 // pred_check
    _
  $region7: #{dqn_forward.4} parent=0 // pred_check_branch
    %11 = sbr.rel (0) target = $region9
  $region8: #{dqn_forward.4} parent=0 // pred_region
    _
  $region9: #{dqn_forward.4} parent=0 // pred_fallthru
    _
  // Predicated region
  $region10: #{dqn_forward.4} parent=0 // pred_check
    _
  $region11: #{dqn_forward.4} parent=0 // pred_check_branch
    %13 = sbr.rel (0) target = $region13
  $region12: #{dqn_forward.4} parent=0 // pred_region
    _
  $region13: #{dqn_forward.4} parent=0 // pred_fallthru
    _
  %v15 = vld [vmem:[%s0] sm:$0xff]
  %v16 = vld [vmem:[%s0 + $0x8] sm:$0xff]
  %v17 = vld [vmem:[%s0 + $0x10] sm:$0xff]
  %v18 = vld [vmem:[%s0 + $0x18] sm:$0xff]
  %v19 = vld [vmem:[%s1] sm:$0xf]
  %v20 = vld [vmem:[%s1 + $0x4] sm:$0xf]
  %v21 = vld [vmem:[%s1 + $0x8] sm:$0xf]
  %v22 = vld [vmem:[%s1 + $0xc] sm:$0xf]
  %v23 = vld [vmem:[%s1 + $0x10] sm:$0xf]
  %v24 = vld [vmem:[%s1 + $0x14] sm:$0xf]
  %v25 = vld [vmem:[%s1 + $0x18] sm:$0xf]
  %v26 = vld [vmem:[%s1 + $0x1c] sm:$0xf]
  %v27 = vld [vmem:[%s1 + $0x20] sm:$0xf]
  %v28 = vld [vmem:[%s1 + $0x24] sm:$0xf]
  %v29 = vld [vmem:[%s1 + $0x28] sm:$0xf]
  %v30 = vld [vmem:[%s1 + $0x2c] sm:$0xf]
  %v31 = vld [vmem:[%s1 + $0x30] sm:$0xf]
  %v32 = vld [vmem:[%s1 + $0x34] sm:$0xf]
  %v33 = vld [vmem:[%s1 + $0x38] sm:$0xf]
  %v34 = vld [vmem:[%s1 + $0x3c] sm:$0xf]
  %v35 = vld [vmem:[%s1 + $0x40] sm:$0xf]
  %v36 = vld [vmem:[%s1 + $0x44] sm:$0xf]
  %v37 = vld [vmem:[%s1 + $0x48] sm:$0xf]
  %v38 = vld [vmem:[%s1 + $0x4c] sm:$0xf]
  %v39 = vld [vmem:[%s1 + $0x50] sm:$0xf]
  %v40 = vld [vmem:[%s1 + $0x54] sm:$0xf]
  %v41 = vld [vmem:[%s1 + $0x58] sm:$0xf]
  %v42 = vld [vmem:[%s1 + $0x5c] sm:$0xf]
  %v43 = vld [vmem:[%s1 + $0x60] sm:$0xf]
  %v44 = vld [vmem:[%s1 + $0x64] sm:$0xf]
  %v45 = vld [vmem:[%s1 + $0x68] sm:$0xf]
  %v46 = vld [vmem:[%s1 + $0x6c] sm:$0xf]
  %v47 = vld [vmem:[%s1 + $0x70] sm:$0xf]
  %v48 = vld [vmem:[%s1 + $0x74] sm:$0xf]
  %v49 = vld [vmem:[%s1 + $0x78] sm:$0xf]
  %v50 = vld [vmem:[%s1 + $0x7c] sm:$0xf]
  %v51 = vld [vmem:[%s2] sm:$0xff]
  %v52 = vld [vmem:[%s2 + $0x8] sm:$0xff]
  %v53 = vld [vmem:[%s2 + $0x10] sm:$0xff]
  %v54 = vld [vmem:[%s2 + $0x18] sm:$0xff]
  %56 = vset.pattern.permute.xlu0 0
  %57 = vperm.xlu0 %56, %v51
  %v58 = vpop.permute.xlu0 %57
  %61 = vset.pattern.permute.xlu0 0
  %62 = vperm.xlu0 %61, %v52
  %v63 = vpop.permute.xlu0 %62
  %66 = vset.pattern.permute.xlu0 0
  %67 = vperm.xlu0 %66, %v53
  %v68 = vpop.permute.xlu0 %67
  %71 = vset.pattern.permute.xlu0 0
  %72 = vperm.xlu0 %71, %v54
  %v73 = vpop.permute.xlu0 %72
  %v79 = vunpack.c.l.b16 %v15
  %v80 = vunpack.c.h.b16 %v15
  %v81 = vunpack.c.l.b16 %v16
  %v82 = vunpack.c.h.b16 %v16
  %v83 = vunpack.c.l.b16 %v17
  %v84 = vunpack.c.h.b16 %v17
  %v85 = vunpack.c.l.b16 %v18
  %v86 = vunpack.c.h.b16 %v18
  %v87 = vpack.c.b16 %v81, %v79
  %v88 = vpack.c.b16 %v82, %v80
  %v89 = vpack.c.b16 %v85, %v83
  %v90 = vpack.c.b16 %v86, %v84
  %v127 = vunpack.c.l.b16 %v19
  %v128 = vunpack.c.l.b16 %v20
  %v129 = vunpack.c.l.b16 %v21
  %v130 = vunpack.c.l.b16 %v22
  %v131 = vunpack.c.l.b16 %v23
  %v132 = vunpack.c.l.b16 %v24
  %v133 = vunpack.c.l.b16 %v25
  %v134 = vunpack.c.l.b16 %v26
  %v135 = vunpack.c.l.b16 %v27
  %v136 = vunpack.c.l.b16 %v28
  %v137 = vunpack.c.l.b16 %v29
  %v138 = vunpack.c.l.b16 %v30
  %v139 = vunpack.c.l.b16 %v31
  %v140 = vunpack.c.l.b16 %v32
  %v141 = vunpack.c.l.b16 %v33
  %v142 = vunpack.c.l.b16 %v34
  %v143 = vunpack.c.l.b16 %v35
  %v144 = vunpack.c.l.b16 %v36
  %v145 = vunpack.c.l.b16 %v37
  %v146 = vunpack.c.l.b16 %v38
  %v147 = vunpack.c.l.b16 %v39
  %v148 = vunpack.c.l.b16 %v40
  %v149 = vunpack.c.l.b16 %v41
  %v150 = vunpack.c.l.b16 %v42
  %v151 = vunpack.c.l.b16 %v43
  %v152 = vunpack.c.l.b16 %v44
  %v153 = vunpack.c.l.b16 %v45
  %v154 = vunpack.c.l.b16 %v46
  %v155 = vunpack.c.l.b16 %v47
  %v156 = vunpack.c.l.b16 %v48
  %v157 = vunpack.c.l.b16 %v49
  %v158 = vunpack.c.l.b16 %v50
  %v159 = vpack.c.b16 %v128, %v127
  %v160 = vpack.c.b16 %v130, %v129
  %v161 = vpack.c.b16 %v132, %v131
  %v162 = vpack.c.b16 %v134, %v133
  %v163 = vpack.c.b16 %v136, %v135
  %v164 = vpack.c.b16 %v138, %v137
  %v165 = vpack.c.b16 %v140, %v139
  %v166 = vpack.c.b16 %v142, %v141
  %v167 = vpack.c.b16 %v144, %v143
  %v168 = vpack.c.b16 %v146, %v145
  %v169 = vpack.c.b16 %v148, %v147
  %v170 = vpack.c.b16 %v150, %v149
  %v171 = vpack.c.b16 %v152, %v151
  %v172 = vpack.c.b16 %v154, %v153
  %v173 = vpack.c.b16 %v156, %v155
  %v174 = vpack.c.b16 %v158, %v157
  %191 = vmatprep.subr.bf16.mxu0 0
  %192 = vmatpush1.bf16.msra.mxu0 %v159
  %193 = vmatprep.subr.bf16.mxu0 0
  %194 = vmatpush1.bf16.msra.mxu0 %v160
  %195 = vmatprep.subr.bf16.mxu0 0
  %196 = vmatpush1.bf16.msra.mxu0 %v161
  %197 = vmatprep.subr.bf16.mxu0 0
  %198 = vmatpush1.bf16.msra.mxu0 %v162
  %199 = vmatprep.subr.bf16.mxu0 0
  %200 = vmatpush1.bf16.msra.mxu0 %v163
  %201 = vmatprep.subr.bf16.mxu0 0
  %202 = vmatpush1.bf16.msra.mxu0 %v164
  %203 = vmatprep.subr.bf16.mxu0 0
  %204 = vmatpush1.bf16.msra.mxu0 %v165
  %205 = vmatprep.subr.bf16.mxu0 0
  %206 = vmatpush1.bf16.msra.mxu0 %v166
  %207 = vmatprep.subr.bf16.mxu0 0
  %208 = vmatpush1.bf16.msra.mxu0 %v167
  %209 = vmatprep.subr.bf16.mxu0 0
  %210 = vmatpush1.bf16.msra.mxu0 %v168
  %211 = vmatprep.subr.bf16.mxu0 0
  %212 = vmatpush1.bf16.msra.mxu0 %v169
  %213 = vmatprep.subr.bf16.mxu0 0
  %214 = vmatpush1.bf16.msra.mxu0 %v170
  %215 = vmatprep.subr.bf16.mxu0 0
  %216 = vmatpush1.bf16.msra.mxu0 %v171
  %217 = vmatprep.subr.bf16.mxu0 0
  %218 = vmatpush1.bf16.msra.mxu0 %v172
  %219 = vmatprep.subr.bf16.mxu0 0
  %220 = vmatpush1.bf16.msra.mxu0 %v173
  %221 = vmatprep.subr.bf16.mxu0 0
  %222 = vmatpush1.bf16.msra.mxu0 %v174
  %223 = vmatprep.mubr.bf16.mxu0 %v88
  %224 = vmatmul.mubr.bf16.gmra.mrb[0].mxu0 %v87
  %v225 = vpop.f32.mrb[0].mxu0
  %v226 = vadd.f32 %v58, %v225
  %v227 = vpop.f32.mrb[0].mxu0
  %v228 = vpop.f32.mrb[0].mxu0
  %v229 = vadd.f32 %v63, %v228
  %v230 = vpop.f32.mrb[0].mxu0
  %231 = vmatprep.mubr.bf16.mxu0 %v90
  %232 = vmatmul.mubr.bf16.gmra.mrb[0].mxu0 %v89
  %v233 = vpop.f32.mrb[0].mxu0
  %v234 = vadd.f32 %v68, %v233
  %v235 = vpop.f32.mrb[0].mxu0
  %v236 = vpop.f32.mrb[0].mxu0
  %v237 = vadd.f32 %v73, %v236
  %v238 = vpop.f32.mrb[0].mxu0
  %239 = vdwg.mxu0
  %v240 = vmax.f32 %v226, 0.0
  %v241 = vmax.f32 %v229, 0.0
  %v242 = vmax.f32 %v234, 0.0
  %v243 = vmax.f32 %v237, 0.0
  %v244 = vpack.c.bf16 %v241, %v240
  %v245 = vpack.c.bf16 %v243, %v242
  %v248 = vunpack.c.l.b16 %v244
  %v249 = vunpack.c.h.b16 %v244
  %v250 = vunpack.c.l.b16 %v245
  %v251 = vunpack.c.h.b16 %v245
  %v252 = vpack.c.b16 %v248, %v248
  %v253 = vpack.c.b16 %v249, %v249
  %v254 = vpack.c.b16 %v250, %v250
  %v255 = vpack.c.b16 %v251, %v251
  %260 = vst [vmem:[%s3] sm:$0xf] %v252
  %261 = vst [vmem:[%s3 + $0x4] sm:$0xf] %v253
  %262 = vst [vmem:[%s3 + $0x8] sm:$0xf] %v254
  %263 = vst [vmem:[%s3 + $0xc] sm:$0xf] %v255
  // Predicated region
  $region14: #{dqn_forward.4} parent=0 // pred_check
    _
  $region15: #{dqn_forward.4} parent=0 // pred_check_branch
    %265 = sbr.rel (0) target = $region17
  $region16: #{dqn_forward.4} parent=0 // pred_region
    _
  $region17: #{dqn_forward.4} parent=0 // pred_fallthru
    _
  // Predicated region
  $region18: #{dqn_forward.4} parent=0 // pred_check
    _
  $region19: #{dqn_forward.4} parent=0 // pred_check_branch
    %267 = sbr.rel (0) target = $region21
  $region20: #{dqn_forward.4} parent=0 // pred_region
    _
  $region21: #{dqn_forward.4} parent=0 // pred_fallthru
    _

// kernel: dqn_forward.5
$region0: #{dqn_forward.5}
  #allocation0 [shape = 'u32[]', space=smem, size = 0x4, offset = 0x4, fixed_abs, tag = 'smem constant byte address 0x4 - core index']
  #allocation1 [shape = 'u32[144,128]{1,0:T(1,128)}', space=vmem, size = 0x12000, scoped, tag = 'internal scratch']
  %s0 = inlined_call_operand.vmem [shape: bf16[64,512], index: 0, kind: input, shape index: {}]
  %s1 = inlined_call_operand.vmem [shape: bf16[512,18], index: 1, kind: input, shape index: {}]
  %s2 = inlined_call_operand.vmem [shape: f32[64,1], index: 2, kind: input, shape index: {}]
  %s3 = inlined_call_operand.vmem [shape: bf16[64,18], index: 3, kind: output, shape index: {}]
  %s4 = sld [smem:[#allocation0]]
  $region22: #{dqn_forward.5} parent=0
    _
  %s6 = ssub.s32 1, %s4
  %s7 = scalar_select 0, %s6, %s4
  // Predicated region
  $region2: #{dqn_forward.5} parent=0 // pred_check
    _
  $region3: #{dqn_forward.5} parent=0 // pred_check_branch
    %9 = sbr.rel (0) target = $region5
  $region4: #{dqn_forward.5} parent=0 // pred_region
    _
  $region5: #{dqn_forward.5} parent=0 // pred_fallthru
    _
  // Predicated region
  $region6: #{dqn_forward.5} parent=0 // pred_check
    _
  $region7: #{dqn_forward.5} parent=0 // pred_check_branch
    %11 = sbr.rel (0) target = $region9
  $region8: #{dqn_forward.5} parent=0 // pred_region
    _
  $region9: #{dqn_forward.5} parent=0 // pred_fallthru
    _
  // Predicated region
  $region10: #{dqn_forward.5} parent=0 // pred_check
    _
  $region11: #{dqn_forward.5} parent=0 // pred_check_branch
    %13 = sbr.rel (0) target = $region13
  $region12: #{dqn_forward.5} parent=0 // pred_region
    _
  $region13: #{dqn_forward.5} parent=0 // pred_fallthru
    _
  %v15 = vld [vmem:[%s0] sm:$0xff]
  %v16 = vld [vmem:[%s0 + $0x8] sm:$0xff]
  %v17 = vld [vmem:[%s0 + $0x10] sm:$0xff]
  %v18 = vld [vmem:[%s0 + $0x18] sm:$0xff]
  %v19 = vld [vmem:[%s0 + $0x20] sm:$0xff]
  %v20 = vld [vmem:[%s0 + $0x28] sm:$0xff]
  %v21 = vld [vmem:[%s0 + $0x30] sm:$0xff]
  %v22 = vld [vmem:[%s0 + $0x38] sm:$0xff]
  %v23 = vld [vmem:[%s0 + $0x40] sm:$0xff]
  %v24 = vld [vmem:[%s0 + $0x48] sm:$0xff]
  %v25 = vld [vmem:[%s0 + $0x50] sm:$0xff]
  %v26 = vld [vmem:[%s0 + $0x58] sm:$0xff]
  %v27 = vld [vmem:[%s0 + $0x60] sm:$0xff]
  %v28 = vld [vmem:[%s0 + $0x68] sm:$0xff]
  %v29 = vld [vmem:[%s0 + $0x70] sm:$0xff]
  %v30 = vld [vmem:[%s0 + $0x78] sm:$0xff]
  %v31 = vld [vmem:[%s1] sm:$0xf]
  %v32 = vld [vmem:[%s1 + $0x4] sm:$0xf]
  %v33 = vld [vmem:[%s1 + $0x8] sm:$0xf]
  %v34 = vld [vmem:[%s1 + $0xc] sm:$0xf]
  %v35 = vld [vmem:[%s1 + $0x10] sm:$0xf]
  %v36 = vld [vmem:[%s1 + $0x14] sm:$0xf]
  %v37 = vld [vmem:[%s1 + $0x18] sm:$0xf]
  %v38 = vld [vmem:[%s1 + $0x1c] sm:$0xf]
  %v39 = vld [vmem:[%s1 + $0x20] sm:$0xf]
  %v40 = vld [vmem:[%s1 + $0x24] sm:$0xf]
  %v41 = vld [vmem:[%s1 + $0x28] sm:$0xf]
  %v42 = vld [vmem:[%s1 + $0x2c] sm:$0xf]
  %v43 = vld [vmem:[%s1 + $0x30] sm:$0xf]
  %v44 = vld [vmem:[%s1 + $0x34] sm:$0xf]
  %v45 = vld [vmem:[%s1 + $0x38] sm:$0xf]
  %v46 = vld [vmem:[%s1 + $0x3c] sm:$0xf]
  %v47 = vld [vmem:[%s1 + $0x40] sm:$0xf]
  %v48 = vld [vmem:[%s1 + $0x44] sm:$0xf]
  %v49 = vld [vmem:[%s1 + $0x48] sm:$0xf]
  %v50 = vld [vmem:[%s1 + $0x4c] sm:$0xf]
  %v51 = vld [vmem:[%s1 + $0x50] sm:$0xf]
  %v52 = vld [vmem:[%s1 + $0x54] sm:$0xf]
  %v53 = vld [vmem:[%s1 + $0x58] sm:$0xf]
  %v54 = vld [vmem:[%s1 + $0x5c] sm:$0xf]
  %v55 = vld [vmem:[%s1 + $0x60] sm:$0xf]
  %v56 = vld [vmem:[%s1 + $0x64] sm:$0xf]
  %v57 = vld [vmem:[%s1 + $0x68] sm:$0xf]
  %v58 = vld [vmem:[%s1 + $0x6c] sm:$0xf]
  %v59 = vld [vmem:[%s1 + $0x70] sm:$0xf]
  %v60 = vld [vmem:[%s1 + $0x74] sm:$0xf]
  %v61 = vld [vmem:[%s1 + $0x78] sm:$0xf]
  %v62 = vld [vmem:[%s1 + $0x7c] sm:$0xf]
  %v63 = vld [vmem:[%s1 + $0x80] sm:$0xf]
  %v64 = vld [vmem:[%s1 + $0x84] sm:$0xf]
  %v65 = vld [vmem:[%s1 + $0x88] sm:$0xf]
  %v66 = vld [vmem:[%s1 + $0x8c] sm:$0xf]
  %v67 = vld [vmem:[%s1 + $0x90] sm:$0xf]
  %v68 = vld [vmem:[%s1 + $0x94] sm:$0xf]
  %v69 = vld [vmem:[%s1 + $0x98] sm:$0xf]
  %v70 = vld [vmem:[%s1 + $0x9c] sm:$0xf]
  %v71 = vld [vmem:[%s1 + $0xa0] sm:$0xf]
  %v72 = vld [vmem:[%s1 + $0xa4] sm:$0xf]
  %v73 = vld [vmem:[%s1 + $0xa8] sm:$0xf]
  %v74 = vld [vmem:[%s1 + $0xac] sm:$0xf]
  %v75 = vld [vmem:[%s1 + $0xb0] sm:$0xf]
  %v76 = vld [vmem:[%s1 + $0xb4] sm:$0xf]
  %v77 = vld [vmem:[%s1 + $0xb8] sm:$0xf]
  %v78 = vld [vmem:[%s1 + $0xbc] sm:$0xf]
  %v79 = vld [vmem:[%s1 + $0xc0] sm:$0xf]
  %v80 = vld [vmem:[%s1 + $0xc4] sm:$0xf]
  %v81 = vld [vmem:[%s1 + $0xc8] sm:$0xf]
  %v82 = vld [vmem:[%s1 + $0xcc] sm:$0xf]
  %v83 = vld [vmem:[%s1 + $0xd0] sm:$0xf]
  %v84 = vld [vmem:[%s1 + $0xd4] sm:$0xf]
  %v85 = vld [vmem:[%s1 + $0xd8] sm:$0xf]
  %v86 = vld [vmem:[%s1 + $0xdc] sm:$0xf]
  %v87 = vld [vmem:[%s1 + $0xe0] sm:$0xf]
  %v88 = vld [vmem:[%s1 + $0xe4] sm:$0xf]
  %v89 = vld [vmem:[%s1 + $0xe8] sm:$0xf]
  %v90 = vld [vmem:[%s1 + $0xec] sm:$0xf]
  %v91 = vld [vmem:[%s1 + $0xf0] sm:$0xf]
  %v92 = vld [vmem:[%s1 + $0xf4] sm:$0xf]
  %v93 = vld [vmem:[%s1 + $0xf8] sm:$0xf]
  %v94 = vld [vmem:[%s1 + $0xfc] sm:$0xf]
  %v95 = vld [vmem:[%s2] sm:$0xff]
  %v96 = vld [vmem:[%s2 + $0x8] sm:$0xff]
  %v97 = vld [vmem:[%s2 + $0x10] sm:$0xff]
  %v98 = vld [vmem:[%s2 + $0x18] sm:$0xff]
  %v99 = vld [vmem:[%s2 + $0x20] sm:$0xff]
  %v100 = vld [vmem:[%s2 + $0x28] sm:$0xff]
  %v101 = vld [vmem:[%s2 + $0x30] sm:$0xff]
  %v102 = vld [vmem:[%s2 + $0x38] sm:$0xff]
  %104 = vset.pattern.permute.xlu0 0
  %105 = vperm.xlu0 %104, %v95
  %v106 = vpop.permute.xlu0 %105
  %109 = vset.pattern.permute.xlu0 0
  %110 = vperm.xlu0 %109, %v96
  %v111 = vpop.permute.xlu0 %110
  %114 = vset.pattern.permute.xlu0 0
  %115 = vperm.xlu0 %114, %v97
  %v116 = vpop.permute.xlu0 %115
  %119 = vset.pattern.permute.xlu0 0
  %120 = vperm.xlu0 %119, %v98
  %v121 = vpop.permute.xlu0 %120
  %124 = vset.pattern.permute.xlu0 0
  %125 = vperm.xlu0 %124, %v99
  %v126 = vpop.permute.xlu0 %125
  %129 = vset.pattern.permute.xlu0 0
  %130 = vperm.xlu0 %129, %v100
  %v131 = vpop.permute.xlu0 %130
  %134 = vset.pattern.permute.xlu0 0
  %135 = vperm.xlu0 %134, %v101
  %v136 = vpop.permute.xlu0 %135
  %139 = vset.pattern.permute.xlu0 0
  %140 = vperm.xlu0 %139, %v102
  %v141 = vpop.permute.xlu0 %140
  %v159 = vunpack.c.l.b16 %v15
  %v160 = vunpack.c.h.b16 %v15
  %v161 = vunpack.c.l.b16 %v16
  %v162 = vunpack.c.h.b16 %v16
  %v163 = vunpack.c.l.b16 %v17
  %v164 = vunpack.c.h.b16 %v17
  %v165 = vunpack.c.l.b16 %v18
  %v166 = vunpack.c.h.b16 %v18
  %v167 = vunpack.c.l.b16 %v19
  %v168 = vunpack.c.h.b16 %v19
  %v169 = vunpack.c.l.b16 %v20
  %v170 = vunpack.c.h.b16 %v20
  %v171 = vunpack.c.l.b16 %v21
  %v172 = vunpack.c.h.b16 %v21
  %v173 = vunpack.c.l.b16 %v22
  %v174 = vunpack.c.h.b16 %v22
  %v175 = vunpack.c.l.b16 %v23
  %v176 = vunpack.c.h.b16 %v23
  %v177 = vunpack.c.l.b16 %v24
  %v178 = vunpack.c.h.b16 %v24
  %v179 = vunpack.c.l.b16 %v25
  %v180 = vunpack.c.h.b16 %v25
  %v181 = vunpack.c.l.b16 %v26
  %v182 = vunpack.c.h.b16 %v26
  %v183 = vunpack.c.l.b16 %v27
  %v184 = vunpack.c.h.b16 %v27
  %v185 = vunpack.c.l.b16 %v28
  %v186 = vunpack.c.h.b16 %v28
  %v187 = vunpack.c.l.b16 %v29
  %v188 = vunpack.c.h.b16 %v29
  %v189 = vunpack.c.l.b16 %v30
  %v190 = vunpack.c.h.b16 %v30
  %v191 = vpack.c.b16 %v163, %v159
  %v192 = vpack.c.b16 %v164, %v160
  %v193 = vpack.c.b16 %v165, %v161
  %v194 = vpack.c.b16 %v166, %v162
  %v195 = vpack.c.b16 %v171, %v167
  %v196 = vpack.c.b16 %v172, %v168
  %v197 = vpack.c.b16 %v173, %v169
  %v198 = vpack.c.b16 %v174, %v170
  %v199 = vpack.c.b16 %v179, %v175
  %v200 = vpack.c.b16 %v180, %v176
  %v201 = vpack.c.b16 %v181, %v177
  %v202 = vpack.c.b16 %v182, %v178
  %v203 = vpack.c.b16 %v187, %v183
  %v204 = vpack.c.b16 %v188, %v184
  %v205 = vpack.c.b16 %v189, %v185
  %v206 = vpack.c.b16 %v190, %v186
  %v287 = vunpack.c.l.b16 %v31
  %v288 = vunpack.c.l.b16 %v32
  %v289 = vunpack.c.l.b16 %v33
  %v290 = vunpack.c.l.b16 %v34
  %v291 = vunpack.c.l.b16 %v35
  %v292 = vunpack.c.l.b16 %v36
  %v293 = vunpack.c.l.b16 %v37
  %v294 = vunpack.c.l.b16 %v38
  %v295 = vunpack.c.l.b16 %v39
  %v296 = vunpack.c.l.b16 %v40
  %v297 = vunpack.c.l.b16 %v41
  %v298 = vunpack.c.l.b16 %v42
  %v299 = vunpack.c.l.b16 %v43
  %v300 = vunpack.c.l.b16 %v44
  %v301 = vunpack.c.l.b16 %v45
  %v302 = vunpack.c.l.b16 %v46
  %v303 = vunpack.c.l.b16 %v47
  %v304 = vunpack.c.l.b16 %v48
  %v305 = vunpack.c.l.b16 %v49
  %v306 = vunpack.c.l.b16 %v50
  %v307 = vunpack.c.l.b16 %v51
  %v308 = vunpack.c.l.b16 %v52
  %v309 = vunpack.c.l.b16 %v53
  %v310 = vunpack.c.l.b16 %v54
  %v311 = vunpack.c.l.b16 %v55
  %v312 = vunpack.c.l.b16 %v56
  %v313 = vunpack.c.l.b16 %v57
  %v314 = vunpack.c.l.b16 %v58
  %v315 = vunpack.c.l.b16 %v59
  %v316 = vunpack.c.l.b16 %v60
  %v317 = vunpack.c.l.b16 %v61
  %v318 = vunpack.c.l.b16 %v62
  %v319 = vunpack.c.l.b16 %v63
  %v320 = vunpack.c.l.b16 %v64
  %v321 = vunpack.c.l.b16 %v65
  %v322 = vunpack.c.l.b16 %v66
  %v323 = vunpack.c.l.b16 %v67
  %v324 = vunpack.c.l.b16 %v68
  %v325 = vunpack.c.l.b16 %v69
  %v326 = vunpack.c.l.b16 %v70
  %v327 = vunpack.c.l.b16 %v71
  %v328 = vunpack.c.l.b16 %v72
  %v329 = vunpack.c.l.b16 %v73
  %v330 = vunpack.c.l.b16 %v74
  %v331 = vunpack.c.l.b16 %v75
  %v332 = vunpack.c.l.b16 %v76
  %v333 = vunpack.c.l.b16 %v77
  %v334 = vunpack.c.l.b16 %v78
  %v335 = vunpack.c.l.b16 %v79
  %v336 = vunpack.c.l.b16 %v80
  %v337 = vunpack.c.l.b16 %v81
  %v338 = vunpack.c.l.b16 %v82
  %v339 = vunpack.c.l.b16 %v83
  %v340 = vunpack.c.l.b16 %v84
  %v341 = vunpack.c.l.b16 %v85
  %v342 = vunpack.c.l.b16 %v86
  %v343 = vunpack.c.l.b16 %v87
  %v344 = vunpack.c.l.b16 %v88
  %v345 = vunpack.c.l.b16 %v89
  %v346 = vunpack.c.l.b16 %v90
  %v347 = vunpack.c.l.b16 %v91
  %v348 = vunpack.c.l.b16 %v92
  %v349 = vunpack.c.l.b16 %v93
  %v350 = vunpack.c.l.b16 %v94
  %v351 = vpack.c.b16 %v288, %v287
  %v352 = vpack.c.b16 %v290, %v289
  %v353 = vpack.c.b16 %v292, %v291
  %v354 = vpack.c.b16 %v294, %v293
  %v355 = vpack.c.b16 %v296, %v295
  %v356 = vpack.c.b16 %v298, %v297
  %v357 = vpack.c.b16 %v300, %v299
  %v358 = vpack.c.b16 %v302, %v301
  %v359 = vpack.c.b16 %v304, %v303
  %v360 = vpack.c.b16 %v306, %v305
  %v361 = vpack.c.b16 %v308, %v307
  %v362 = vpack.c.b16 %v310, %v309
  %v363 = vpack.c.b16 %v312, %v311
  %v364 = vpack.c.b16 %v314, %v313
  %v365 = vpack.c.b16 %v316, %v315
  %v366 = vpack.c.b16 %v318, %v317
  %v367 = vpack.c.b16 %v320, %v319
  %v368 = vpack.c.b16 %v322, %v321
  %v369 = vpack.c.b16 %v324, %v323
  %v370 = vpack.c.b16 %v326, %v325
  %v371 = vpack.c.b16 %v328, %v327
  %v372 = vpack.c.b16 %v330, %v329
  %v373 = vpack.c.b16 %v332, %v331
  %v374 = vpack.c.b16 %v334, %v333
  %v375 = vpack.c.b16 %v336, %v335
  %v376 = vpack.c.b16 %v338, %v337
  %v377 = vpack.c.b16 %v340, %v339
  %v378 = vpack.c.b16 %v342, %v341
  %v379 = vpack.c.b16 %v344, %v343
  %v380 = vpack.c.b16 %v346, %v345
  %v381 = vpack.c.b16 %v348, %v347
  %v382 = vpack.c.b16 %v350, %v349
  %415 = vmatprep.subr.bf16.mxu0 0
  %416 = vmatpush1.bf16.msra.mxu0 %v351
  %417 = vmatprep.subr.bf16.mxu0 0
  %418 = vmatpush1.bf16.msra.mxu0 %v352
  %419 = vmatprep.subr.bf16.mxu0 0
  %420 = vmatpush1.bf16.msra.mxu0 %v353
  %421 = vmatprep.subr.bf16.mxu0 0
  %422 = vmatpush1.bf16.msra.mxu0 %v354
  %423 = vmatprep.subr.bf16.mxu0 0
  %424 = vmatpush1.bf16.msra.mxu0 %v355
  %425 = vmatprep.subr.bf16.mxu0 0
  %426 = vmatpush1.bf16.msra.mxu0 %v356
  %427 = vmatprep.subr.bf16.mxu0 0
  %428 = vmatpush1.bf16.msra.mxu0 %v357
  %429 = vmatprep.subr.bf16.mxu0 0
  %430 = vmatpush1.bf16.msra.mxu0 %v358
  %431 = vmatprep.subr.bf16.mxu0 0
  %432 = vmatpush1.bf16.msra.mxu0 %v359
  %433 = vmatprep.subr.bf16.mxu0 0
  %434 = vmatpush1.bf16.msra.mxu0 %v360
  %435 = vmatprep.subr.bf16.mxu0 0
  %436 = vmatpush1.bf16.msra.mxu0 %v361
  %437 = vmatprep.subr.bf16.mxu0 0
  %438 = vmatpush1.bf16.msra.mxu0 %v362
  %439 = vmatprep.subr.bf16.mxu0 0
  %440 = vmatpush1.bf16.msra.mxu0 %v363
  %441 = vmatprep.subr.bf16.mxu0 0
  %442 = vmatpush1.bf16.msra.mxu0 %v364
  %443 = vmatprep.subr.bf16.mxu0 0
  %444 = vmatpush1.bf16.msra.mxu0 %v365
  %445 = vmatprep.subr.bf16.mxu0 0
  %446 = vmatpush1.bf16.msra.mxu0 %v366
  %447 = vmatprep.mubr.bf16.mxu0 %v192
  %448 = vmatmul.mubr.bf16.gmra.mrb[0].mxu0 %v191
  %v449 = vpop.f32.mrb[0].mxu0
  %v450 = vadd.f32 %v106, %v449
  %v451 = vpop.f32.mrb[0].mxu0
  %v452 = vpop.f32.mrb[0].mxu0
  %v453 = vadd.f32 %v111, %v452
  %v454 = vpop.f32.mrb[0].mxu0
  %455 = vmatprep.mubr.bf16.mxu0 %v196
  %456 = vmatmul.mubr.bf16.gmra.mrb[0].mxu0 %v195
  %v457 = vpop.f32.mrb[0].mxu0
  %v458 = vadd.f32 %v116, %v457
  %v459 = vpop.f32.mrb[0].mxu0
  %v460 = vpop.f32.mrb[0].mxu0
  %v461 = vadd.f32 %v121, %v460
  %v462 = vpop.f32.mrb[0].mxu0
  %463 = vmatprep.mubr.bf16.mxu0 %v200
  %464 = vmatmul.mubr.bf16.gmra.mrb[0].mxu0 %v199
  %v465 = vpop.f32.mrb[0].mxu0
  %v466 = vadd.f32 %v126, %v465
  %v467 = vpop.f32.mrb[0].mxu0
  %v468 = vpop.f32.mrb[0].mxu0
  %v469 = vadd.f32 %v131, %v468
  %v470 = vpop.f32.mrb[0].mxu0
  %471 = vmatprep.mubr.bf16.mxu0 %v204
  %472 = vmatmul.mubr.bf16.gmra.mrb[0].mxu0 %v203
  %v473 = vpop.f32.mrb[0].mxu0
  %v474 = vadd.f32 %v136, %v473
  %v475 = vpop.f32.mrb[0].mxu0
  %v476 = vpop.f32.mrb[0].mxu0
  %v477 = vadd.f32 %v141, %v476
  %v478 = vpop.f32.mrb[0].mxu0
  %479 = vdwg.mxu0
  %480 = vmatprep.subr.bf16.mxu0 0
  %481 = vmatpush1.bf16.msra.mxu0 %v367
  %482 = vmatprep.subr.bf16.mxu0 0
  %483 = vmatpush1.bf16.msra.mxu0 %v368
  %484 = vmatprep.subr.bf16.mxu0 0
  %485 = vmatpush1.bf16.msra.mxu0 %v369
  %486 = vmatprep.subr.bf16.mxu0 0
  %487 = vmatpush1.bf16.msra.mxu0 %v370
  %488 = vmatprep.subr.bf16.mxu0 0
  %489 = vmatpush1.bf16.msra.mxu0 %v371
  %490 = vmatprep.subr.bf16.mxu0 0
  %491 = vmatpush1.bf16.msra.mxu0 %v372
  %492 = vmatprep.subr.bf16.mxu0 0
  %493 = vmatpush1.bf16.msra.mxu0 %v373
  %494 = vmatprep.subr.bf16.mxu0 0
  %495 = vmatpush1.bf16.msra.mxu0 %v374
  %496 = vmatprep.subr.bf16.mxu0 0
  %497 = vmatpush1.bf16.msra.mxu0 %v375
  %498 = vmatprep.subr.bf16.mxu0 0
  %499 = vmatpush1.bf16.msra.mxu0 %v376
  %500 = vmatprep.subr.bf16.mxu0 0
  %501 = vmatpush1.bf16.msra.mxu0 %v377
  %502 = vmatprep.subr.bf16.mxu0 0
  %503 = vmatpush1.bf16.msra.mxu0 %v378
  %504 = vmatprep.subr.bf16.mxu0 0
  %505 = vmatpush1.bf16.msra.mxu0 %v379
  %506 = vmatprep.subr.bf16.mxu0 0
  %507 = vmatpush1.bf16.msra.mxu0 %v380
  %508 = vmatprep.subr.bf16.mxu0 0
  %509 = vmatpush1.bf16.msra.mxu0 %v381
  %510 = vmatprep.subr.bf16.mxu0 0
  %511 = vmatpush1.bf16.msra.mxu0 %v382
  %512 = vmatprep.mubr.bf16.mxu0 %v194
  %513 = vmatmul.mubr.bf16.gmra.mrb[0].mxu0 %v193
  %v514 = vpop.f32.mrb[0].mxu0
  %v515 = vadd.f32 %v450, %v514
  %v516 = vpop.f32.mrb[0].mxu0
  %v517 = vpop.f32.mrb[0].mxu0
  %v518 = vadd.f32 %v453, %v517
  %v519 = vpop.f32.mrb[0].mxu0
  %520 = vmatprep.mubr.bf16.mxu0 %v198
  %521 = vmatmul.mubr.bf16.gmra.mrb[0].mxu0 %v197
  %v522 = vpop.f32.mrb[0].mxu0
  %v523 = vadd.f32 %v458, %v522
  %v524 = vpop.f32.mrb[0].mxu0
  %v525 = vpop.f32.mrb[0].mxu0
  %v526 = vadd.f32 %v461, %v525
  %v527 = vpop.f32.mrb[0].mxu0
  %528 = vmatprep.mubr.bf16.mxu0 %v202
  %529 = vmatmul.mubr.bf16.gmra.mrb[0].mxu0 %v201
  %v530 = vpop.f32.mrb[0].mxu0
  %v531 = vadd.f32 %v466, %v530
  %v532 = vpop.f32.mrb[0].mxu0
  %v533 = vpop.f32.mrb[0].mxu0
  %v534 = vadd.f32 %v469, %v533
  %v535 = vpop.f32.mrb[0].mxu0
  %536 = vmatprep.mubr.bf16.mxu0 %v206
  %537 = vmatmul.mubr.bf16.gmra.mrb[0].mxu0 %v205
  %v538 = vpop.f32.mrb[0].mxu0
  %v539 = vadd.f32 %v474, %v538
  %v540 = vpop.f32.mrb[0].mxu0
  %v541 = vpop.f32.mrb[0].mxu0
  %v542 = vadd.f32 %v477, %v541
  %v543 = vpop.f32.mrb[0].mxu0
  %544 = vdwg.mxu0
  %v545 = vmax.f32 %v515, 0.0
  %v546 = vmax.f32 %v518, 0.0
  %v547 = vmax.f32 %v523, 0.0
  %v548 = vmax.f32 %v526, 0.0
  %v549 = vmax.f32 %v531, 0.0
  %v550 = vmax.f32 %v534, 0.0
  %v551 = vmax.f32 %v539, 0.0
  %v552 = vmax.f32 %v542, 0.0
  %v553 = vpack.c.bf16 %v546, %v545
  %v554 = vpack.c.bf16 %v548, %v547
  %v555 = vpack.c.bf16 %v550, %v549
  %v556 = vpack.c.bf16 %v552, %v551
  %v561 = vunpack.c.l.b16 %v553
  %v562 = vunpack.c.h.b16 %v553
  %v563 = vunpack.c.l.b16 %v554
  %v564 = vunpack.c.h.b16 %v554
  %v565 = vunpack.c.l.b16 %v555
  %v566 = vunpack.c.h.b16 %v555
  %v567 = vunpack.c.l.b16 %v556
  %v568 = vunpack.c.h.b16 %v556
  %v569 = vpack.c.b16 %v561, %v561
  %v570 = vpack.c.b16 %v562, %v562
  %v571 = vpack.c.b16 %v563, %v563
  %v572 = vpack.c.b16 %v564, %v564
  %v573 = vpack.c.b16 %v565, %v565
  %v574 = vpack.c.b16 %v566, %v566
  %v575 = vpack.c.b16 %v567, %v567
  %v576 = vpack.c.b16 %v568, %v568
  %vm585 = vcmask 142336
  %586 = vst.msk [vmem:[%s3] sm:$0xf] %vm585, %v569
  %587 = vst.msk [vmem:[%s3 + $0x4] sm:$0xf] %vm585, %v570
  %588 = vst.msk [vmem:[%s3 + $0x8] sm:$0xf] %vm585, %v571
  %589 = vst.msk [vmem:[%s3 + $0xc] sm:$0xf] %vm585, %v572
  %590 = vst.msk [vmem:[%s3 + $0x10] sm:$0xf] %vm585, %v573
  %591 = vst.msk [vmem:[%s3 + $0x14] sm:$0xf] %vm585, %v574
  %592 = vst.msk [vmem:[%s3 + $0x18] sm:$0xf] %vm585, %v575
  %593 = vst.msk [vmem:[%s3 + $0x1c] sm:$0xf] %vm585, %v576
  // Predicated region
  $region14: #{dqn_forward.5} parent=0 // pred_check
    _
  $region15: #{dqn_forward.5} parent=0 // pred_check_branch
    %595 = sbr.rel (0) target = $region17
  $region16: #{dqn_forward.5} parent=0 // pred_region
    _
  $region17: #{dqn_forward.5} parent=0 // pred_fallthru
    _
  // Predicated region
  $region18: #{dqn_forward.5} parent=0 // pred_check
    _
  $region19: #{dqn_forward.5} parent=0 // pred_check_branch
    %597 = sbr.rel (0) target = $region21
  $region20: #{dqn_forward.5} parent=0 // pred_region
    _
  $region21: #{dqn_forward.5} parent=0 // pred_fallthru
    _

// kernel: dqn_forward.7
$region0: #{dqn_forward.7}
  #allocation0 [shape = 'u32[]', space=smem, size = 0x4, offset = 0x4, fixed_abs, tag = 'smem constant byte address 0x4 - core index']
  #allocation1 [shape = 'u32[144,128]{1,0:T(1,128)}', space=vmem, size = 0x12000, scoped, tag = 'internal scratch']
  %s0 = inlined_call_operand.vmem [shape: bf16[8,64], index: 0, kind: input, shape index: {}]
  %s1 = inlined_call_operand.vmem [shape: bf16[64,2], index: 1, kind: input, shape index: {}]
  %s2 = inlined_call_operand.vmem [shape: f32[8,1], index: 2, kind: input, shape index: {}]
  %s3 = inlined_call_operand.vmem [shape: f32[8,2], index: 3, kind: output, shape index: {}]
  %s4 = sld [smem:[#allocation0]]
  $region22: #{dqn_forward.7} parent=0
    _
  %s6 = ssub.s32 1, %s4
  %s7 = scalar_select 0, %s6, %s4
  // Predicated region
  $region2: #{dqn_forward.7} parent=0 // pred_check
    _
  $region3: #{dqn_forward.7} parent=0 // pred_check_branch
    %9 = sbr.rel (0) target = $region5
  $region4: #{dqn_forward.7} parent=0 // pred_region
    _
  $region5: #{dqn_forward.7} parent=0 // pred_fallthru
    _
  // Predicated region
  $region6: #{dqn_forward.7} parent=0 // pred_check
    _
  $region7: #{dqn_forward.7} parent=0 // pred_check_branch
    %11 = sbr.rel (0) target = $region9
  $region8: #{dqn_forward.7} parent=0 // pred_region
    _
  $region9: #{dqn_forward.7} parent=0 // pred_fallthru
    _
  // Predicated region
  $region10: #{dqn_forward.7} parent=0 // pred_check
    _
  $region11: #{dqn_forward.7} parent=0 // pred_check_branch
    %13 = sbr.rel (0) target = $region13
  $region12: #{dqn_forward.7} parent=0 // pred_region
    _
  $region13: #{dqn_forward.7} parent=0 // pred_fallthru
    _
  %v15 = vld [vmem:[%s0] sm:$0xf]
  %v16 = vld [vmem:[%s1] sm:$0xf]
  %v17 = vld [vmem:[%s1 + $0x4] sm:$0xf]
  %v18 = vld [vmem:[%s1 + $0x8] sm:$0xf]
  %v19 = vld [vmem:[%s1 + $0xc] sm:$0xf]
  %v20 = vld [vmem:[%s1 + $0x10] sm:$0xf]
  %v21 = vld [vmem:[%s1 + $0x14] sm:$0xf]
  %v22 = vld [vmem:[%s1 + $0x18] sm:$0xf]
  %v23 = vld [vmem:[%s1 + $0x1c] sm:$0xf]
  %v24 = vld [vmem:[%s2] sm:$0xff]
  %26 = vset.pattern.permute.xlu0 0
  %27 = vperm.xlu0 %26, %v24
  %v28 = vpop.permute.xlu0 %27
  %v38 = vunpack.c.l.b16 %v16
  %v39 = vunpack.c.l.b16 %v17
  %v40 = vunpack.c.l.b16 %v18
  %v41 = vunpack.c.l.b16 %v19
  %v42 = vunpack.c.l.b16 %v20
  %v43 = vunpack.c.l.b16 %v21
  %v44 = vunpack.c.l.b16 %v22
  %v45 = vunpack.c.l.b16 %v23
  %v46 = vpack.c.b16 %v39, %v38
  %v47 = vpack.c.b16 %v41, %v40
  %v48 = vpack.c.b16 %v43, %v42
  %v49 = vpack.c.b16 %v45, %v44
  %vm54 = vcmask 523264
  %v56 = vsel %vm54, %v15, 0
  %58 = vmatprep.subr.bf16.mxu0 0
  %59 = vmatpush1.bf16.msra.mxu0 %v46
  %60 = vmatprep.subr.bf16.mxu0 0
  %61 = vmatpush1.bf16.msra.mxu0 %v47
  %62 = vmatprep.subr.bf16.mxu0 0
  %63 = vmatpush1.bf16.msra.mxu0 %v48
  %64 = vmatprep.subr.bf16.mxu0 0
  %65 = vmatpush1.bf16.msra.mxu0 %v49
  %66 = vmatprep.subr.bf16.mxu0 0
  %67 = vmatpush1.bf16.msra.mxu0 0
  %68 = vmatprep.subr.bf16.mxu0 0
  %69 = vmatpush1.bf16.msra.mxu0 0
  %70 = vmatprep.subr.bf16.mxu0 0
  %71 = vmatpush1.bf16.msra.mxu0 0
  %72 = vmatprep.subr.bf16.mxu0 0
  %73 = vmatpush1.bf16.msra.mxu0 0
  %74 = vmatprep.subr.bf16.mxu0 0
  %75 = vmatpush1.bf16.msra.mxu0 0
  %76 = vmatprep.subr.bf16.mxu0 0
  %77 = vmatpush1.bf16.msra.mxu0 0
  %78 = vmatprep.subr.bf16.mxu0 0
  %79 = vmatpush1.bf16.msra.mxu0 0
  %80 = vmatprep.subr.bf16.mxu0 0
  %81 = vmatpush1.bf16.msra.mxu0 0
  %82 = vmatprep.subr.bf16.mxu0 0
  %83 = vmatpush1.bf16.msra.mxu0 0
  %84 = vmatprep.subr.bf16.mxu0 0
  %85 = vmatpush1.bf16.msra.mxu0 0
  %86 = vmatprep.subr.bf16.mxu0 0
  %87 = vmatpush1.bf16.msra.mxu0 0
  %88 = vmatprep.subr.bf16.mxu0 0
  %89 = vmatpush1.bf16.msra.mxu0 0
  %90 = vmatprep.mubr.bf16.mxu0 0
  %91 = vmatmul.mubr.bf16.gmra.mrb[0].mxu0 %v56
  %v92 = vpop.f32.mrb[0].mxu0
  %v93 = vadd.f32 %v28, %v92
  %v94 = vpop.f32.mrb[0].mxu0
  %v95 = vpop.f32.mrb[0].mxu0
  %v96 = vpop.f32.mrb[0].mxu0
  %97 = vdwg.mxu0
  %v98 = vmax.f32 %v93, 0.0
  %vm99 = vcmask 15360
  %100 = vst.msk [vmem:[%s3] sm:$0xff] %vm99, %v98
  // Predicated region
  $region14: #{dqn_forward.7} parent=0 // pred_check
    _
  $region15: #{dqn_forward.7} parent=0 // pred_check_branch
    %102 = sbr.rel (0) target = $region17
  $region16: #{dqn_forward.7} parent=0 // pred_region
    _
  $region17: #{dqn_forward.7} parent=0 // pred_fallthru
    _
  // Predicated region
  $region18: #{dqn_forward.7} parent=0 // pred_check
    _
  $region19: #{dqn_forward.7} parent=0 // pred_check_branch
    %104 = sbr.rel (0) target = $region21
  $region20: #{dqn_forward.7} parent=0 // pred_region
    _
  $region21: #{dqn_forward.7} parent=0 // pred_fallthru
    _

// kernel: dqn_forward.6
$region0: #{dqn_forward.6}
  #allocation0 [shape = 'u32[]', space=smem, size = 0x4, offset = 0x4, fixed_abs, tag = 'smem constant byte address 0x4 - core index']
  #allocation1 [shape = 'u32[144,128]{1,0:T(1,128)}', space=vmem, size = 0x12000, scoped, tag = 'internal scratch']
  %s0 = inlined_call_operand.vmem [shape: bf16[64,576], index: 0, kind: input, shape index: {}]
  %s1 = inlined_call_operand.vmem [shape: bf16[576,2], index: 1, kind: input, shape index: {}]
  %s2 = inlined_call_operand.vmem [shape: f32[64,1], index: 2, kind: input, shape index: {}]
  %s3 = inlined_call_operand.vmem [shape: bf16[64,2], index: 3, kind: output, shape index: {}]
  %s4 = sld [smem:[#allocation0]]
  $region22: #{dqn_forward.6} parent=0
    _
  %s6 = ssub.s32 1, %s4
  %s7 = scalar_select 0, %s6, %s4
  // Predicated region
  $region2: #{dqn_forward.6} parent=0 // pred_check
    _
  $region3: #{dqn_forward.6} parent=0 // pred_check_branch
    %9 = sbr.rel (0) target = $region5
  $region4: #{dqn_forward.6} parent=0 // pred_region
    _
  $region5: #{dqn_forward.6} parent=0 // pred_fallthru
    _
  // Predicated region
  $region6: #{dqn_forward.6} parent=0 // pred_check
    _
  $region7: #{dqn_forward.6} parent=0 // pred_check_branch
    %11 = sbr.rel (0) target = $region9
  $region8: #{dqn_forward.6} parent=0 // pred_region
    _
  $region9: #{dqn_forward.6} parent=0 // pred_fallthru
    _
  // Predicated region
  $region10: #{dqn_forward.6} parent=0 // pred_check
    _
  $region11: #{dqn_forward.6} parent=0 // pred_check_branch
    %13 = sbr.rel (0) target = $region13
  $region12: #{dqn_forward.6} parent=0 // pred_region
    _
  $region13: #{dqn_forward.6} parent=0 // pred_fallthru
    _
  %v15 = vld [vmem:[%s0] sm:$0xff]
  %v16 = vld [vmem:[%s0 + $0x8] sm:$0xff]
  %v17 = vld [vmem:[%s0 + $0x10] sm:$0xf]
  %v18 = vld [vmem:[%s0 + $0x14] sm:$0xff]
  %v19 = vld [vmem:[%s0 + $0x1c] sm:$0xff]
  %v20 = vld [vmem:[%s0 + $0x24] sm:$0xf]
  %v21 = vld [vmem:[%s0 + $0x28] sm:$0xff]
  %v22 = vld [vmem:[%s0 + $0x30] sm:$0xff]
  %v23 = vld [vmem:[%s0 + $0x38] sm:$0xf]
  %v24 = vld [vmem:[%s0 + $0x3c] sm:$0xff]
  %v25 = vld [vmem:[%s0 + $0x44] sm:$0xff]
  %v26 = vld [vmem:[%s0 + $0x4c] sm:$0xf]
  %v27 = vld [vmem:[%s0 + $0x50] sm:$0xff]
  %v28 = vld [vmem:[%s0 + $0x58] sm:$0xff]
  %v29 = vld [vmem:[%s0 + $0x60] sm:$0xf]
  %v30 = vld [vmem:[%s0 + $0x64] sm:$0xff]
  %v31 = vld [vmem:[%s0 + $0x6c] sm:$0xff]
  %v32 = vld [vmem:[%s0 + $0x74] sm:$0xf]
  %v33 = vld [vmem:[%s0 + $0x78] sm:$0xff]
  %v34 = vld [vmem:[%s0 + $0x80] sm:$0xff]
  %v35 = vld [vmem:[%s0 + $0x88] sm:$0xf]
  %v36 = vld [vmem:[%s0 + $0x8c] sm:$0xff]
  %v37 = vld [vmem:[%s0 + $0x94] sm:$0xff]
  %v38 = vld [vmem:[%s0 + $0x9c] sm:$0xf]
  %v39 = vld [vmem:[%s1] sm:$0xf]
  %v40 = vld [vmem:[%s1 + $0x4] sm:$0xf]
  %v41 = vld [vmem:[%s1 + $0x8] sm:$0xf]
  %v42 = vld [vmem:[%s1 + $0xc] sm:$0xf]
  %v43 = vld [vmem:[%s1 + $0x10] sm:$0xf]
  %v44 = vld [vmem:[%s1 + $0x14] sm:$0xf]
  %v45 = vld [vmem:[%s1 + $0x18] sm:$0xf]
  %v46 = vld [vmem:[%s1 + $0x1c] sm:$0xf]
  %v47 = vld [vmem:[%s1 + $0x20] sm:$0xf]
  %v48 = vld [vmem:[%s1 + $0x24] sm:$0xf]
  %v49 = vld [vmem:[%s1 + $0x28] sm:$0xf]
  %v50 = vld [vmem:[%s1 + $0x2c] sm:$0xf]
  %v51 = vld [vmem:[%s1 + $0x30] sm:$0xf]
  %v52 = vld [vmem:[%s1 + $0x34] sm:$0xf]
  %v53 = vld [vmem:[%s1 + $0x38] sm:$0xf]
  %v54 = vld [vmem:[%s1 + $0x3c] sm:$0xf]
  %v55 = vld [vmem:[%s1 + $0x40] sm:$0xf]
  %v56 = vld [vmem:[%s1 + $0x44] sm:$0xf]
  %v57 = vld [vmem:[%s1 + $0x48] sm:$0xf]
  %v58 = vld [vmem:[%s1 + $0x4c] sm:$0xf]
  %v59 = vld [vmem:[%s1 + $0x50] sm:$0xf]
  %v60 = vld [vmem:[%s1 + $0x54] sm:$0xf]
  %v61 = vld [vmem:[%s1 + $0x58] sm:$0xf]
  %v62 = vld [vmem:[%s1 + $0x5c] sm:$0xf]
  %v63 = vld [vmem:[%s1 + $0x60] sm:$0xf]
  %v64 = vld [vmem:[%s1 + $0x64] sm:$0xf]
  %v65 = vld [vmem:[%s1 + $0x68] sm:$0xf]
  %v66 = vld [vmem:[%s1 + $0x6c] sm:$0xf]
  %v67 = vld [vmem:[%s1 + $0x70] sm:$0xf]
  %v68 = vld [vmem:[%s1 + $0x74] sm:$0xf]
  %v69 = vld [vmem:[%s1 + $0x78] sm:$0xf]
  %v70 = vld [vmem:[%s1 + $0x7c] sm:$0xf]
  %v71 = vld [vmem:[%s1 + $0x80] sm:$0xf]
  %v72 = vld [vmem:[%s1 + $0x84] sm:$0xf]
  %v73 = vld [vmem:[%s1 + $0x88] sm:$0xf]
  %v74 = vld [vmem:[%s1 + $0x8c] sm:$0xf]
  %v75 = vld [vmem:[%s1 + $0x90] sm:$0xf]
  %v76 = vld [vmem:[%s1 + $0x94] sm:$0xf]
  %v77 = vld [vmem:[%s1 + $0x98] sm:$0xf]
  %v78 = vld [vmem:[%s1 + $0x9c] sm:$0xf]
  %v79 = vld [vmem:[%s1 + $0xa0] sm:$0xf]
  %v80 = vld [vmem:[%s1 + $0xa4] sm:$0xf]
  %v81 = vld [vmem:[%s1 + $0xa8] sm:$0xf]
  %v82 = vld [vmem:[%s1 + $0xac] sm:$0xf]
  %v83 = vld [vmem:[%s1 + $0xb0] sm:$0xf]
  %v84 = vld [vmem:[%s1 + $0xb4] sm:$0xf]
  %v85 = vld [vmem:[%s1 + $0xb8] sm:$0xf]
  %v86 = vld [vmem:[%s1 + $0xbc] sm:$0xf]
  %v87 = vld [vmem:[%s1 + $0xc0] sm:$0xf]
  %v88 = vld [vmem:[%s1 + $0xc4] sm:$0xf]
  %v89 = vld [vmem:[%s1 + $0xc8] sm:$0xf]
  %v90 = vld [vmem:[%s1 + $0xcc] sm:$0xf]
  %v91 = vld [vmem:[%s1 + $0xd0] sm:$0xf]
  %v92 = vld [vmem:[%s1 + $0xd4] sm:$0xf]
  %v93 = vld [vmem:[%s1 + $0xd8] sm:$0xf]
  %v94 = vld [vmem:[%s1 + $0xdc] sm:$0xf]
  %v95 = vld [vmem:[%s1 + $0xe0] sm:$0xf]
  %v96 = vld [vmem:[%s1 + $0xe4] sm:$0xf]
  %v97 = vld [vmem:[%s1 + $0xe8] sm:$0xf]
  %v98 = vld [vmem:[%s1 + $0xec] sm:$0xf]
  %v99 = vld [vmem:[%s1 + $0xf0] sm:$0xf]
  %v100 = vld [vmem:[%s1 + $0xf4] sm:$0xf]
  %v101 = vld [vmem:[%s1 + $0xf8] sm:$0xf]
  %v102 = vld [vmem:[%s1 + $0xfc] sm:$0xf]
  %v103 = vld [vmem:[%s1 + $0x100] sm:$0xf]
  %v104 = vld [vmem:[%s1 + $0x104] sm:$0xf]
  %v105 = vld [vmem:[%s1 + $0x108] sm:$0xf]
  %v106 = vld [vmem:[%s1 + $0x10c] sm:$0xf]
  %v107 = vld [vmem:[%s1 + $0x110] sm:$0xf]
  %v108 = vld [vmem:[%s1 + $0x114] sm:$0xf]
  %v109 = vld [vmem:[%s1 + $0x118] sm:$0xf]
  %v110 = vld [vmem:[%s1 + $0x11c] sm:$0xf]
  %v111 = vld [vmem:[%s2] sm:$0xff]
  %v112 = vld [vmem:[%s2 + $0x8] sm:$0xff]
  %v113 = vld [vmem:[%s2 + $0x10] sm:$0xff]
  %v114 = vld [vmem:[%s2 + $0x18] sm:$0xff]
  %v115 = vld [vmem:[%s2 + $0x20] sm:$0xff]
  %v116 = vld [vmem:[%s2 + $0x28] sm:$0xff]
  %v117 = vld [vmem:[%s2 + $0x30] sm:$0xff]
  %v118 = vld [vmem:[%s2 + $0x38] sm:$0xff]
  %120 = vset.pattern.permute.xlu0 0
  %121 = vperm.xlu0 %120, %v111
  %v122 = vpop.permute.xlu0 %121
  %125 = vset.pattern.permute.xlu0 0
  %126 = vperm.xlu0 %125, %v112
  %v127 = vpop.permute.xlu0 %126
  %130 = vset.pattern.permute.xlu0 0
  %131 = vperm.xlu0 %130, %v113
  %v132 = vpop.permute.xlu0 %131
  %135 = vset.pattern.permute.xlu0 0
  %136 = vperm.xlu0 %135, %v114
  %v137 = vpop.permute.xlu0 %136
  %140 = vset.pattern.permute.xlu0 0
  %141 = vperm.xlu0 %140, %v115
  %v142 = vpop.permute.xlu0 %141
  %145 = vset.pattern.permute.xlu0 0
  %146 = vperm.xlu0 %145, %v116
  %v147 = vpop.permute.xlu0 %146
  %150 = vset.pattern.permute.xlu0 0
  %151 = vperm.xlu0 %150, %v117
  %v152 = vpop.permute.xlu0 %151
  %155 = vset.pattern.permute.xlu0 0
  %156 = vperm.xlu0 %155, %v118
  %v157 = vpop.permute.xlu0 %156
  %v183 = vunpack.c.l.b16 %v15
  %v184 = vunpack.c.h.b16 %v15
  %v185 = vunpack.c.l.b16 %v16
  %v186 = vunpack.c.h.b16 %v16
  %v187 = vunpack.c.l.b16 %v17
  %v188 = vunpack.c.l.b16 %v18
  %v189 = vunpack.c.h.b16 %v18
  %v190 = vunpack.c.l.b16 %v19
  %v191 = vunpack.c.h.b16 %v19
  %v192 = vunpack.c.l.b16 %v20
  %v193 = vunpack.c.l.b16 %v21
  %v194 = vunpack.c.h.b16 %v21
  %v195 = vunpack.c.l.b16 %v22
  %v196 = vunpack.c.h.b16 %v22
  %v197 = vunpack.c.l.b16 %v23
  %v198 = vunpack.c.l.b16 %v24
  %v199 = vunpack.c.h.b16 %v24
  %v200 = vunpack.c.l.b16 %v25
  %v201 = vunpack.c.h.b16 %v25
  %v202 = vunpack.c.l.b16 %v26
  %v203 = vunpack.c.l.b16 %v27
  %v204 = vunpack.c.h.b16 %v27
  %v205 = vunpack.c.l.b16 %v28
  %v206 = vunpack.c.h.b16 %v28
  %v207 = vunpack.c.l.b16 %v29
  %v208 = vunpack.c.l.b16 %v30
  %v209 = vunpack.c.h.b16 %v30
  %v210 = vunpack.c.l.b16 %v31
  %v211 = vunpack.c.h.b16 %v31
  %v212 = vunpack.c.l.b16 %v32
  %v213 = vunpack.c.l.b16 %v33
  %v214 = vunpack.c.h.b16 %v33
  %v215 = vunpack.c.l.b16 %v34
  %v216 = vunpack.c.h.b16 %v34
  %v217 = vunpack.c.l.b16 %v35
  %v218 = vunpack.c.l.b16 %v36
  %v219 = vunpack.c.h.b16 %v36
  %v220 = vunpack.c.l.b16 %v37
  %v221 = vunpack.c.h.b16 %v37
  %v222 = vunpack.c.l.b16 %v38
  %v223 = vpack.c.b16 %v188, %v183
  %v224 = vpack.c.b16 %v189, %v184
  %v225 = vpack.c.b16 %v190, %v185
  %v226 = vpack.c.b16 %v191, %v186
  %v227 = vpack.c.b16 %v192, %v187
  %v228 = vpack.c.b16 %v198, %v193
  %v229 = vpack.c.b16 %v199, %v194
  %v230 = vpack.c.b16 %v200, %v195
  %v231 = vpack.c.b16 %v201, %v196
  %v232 = vpack.c.b16 %v202, %v197
  %v233 = vpack.c.b16 %v208, %v203
  %v234 = vpack.c.b16 %v209, %v204
  %v235 = vpack.c.b16 %v210, %v205
  %v236 = vpack.c.b16 %v211, %v206
  %v237 = vpack.c.b16 %v212, %v207
  %v238 = vpack.c.b16 %v218, %v213
  %v239 = vpack.c.b16 %v219, %v214
  %v240 = vpack.c.b16 %v220, %v215
  %v241 = vpack.c.b16 %v221, %v216
  %v242 = vpack.c.b16 %v222, %v217
  %v331 = vunpack.c.l.b16 %v39
  %v332 = vunpack.c.l.b16 %v40
  %v333 = vunpack.c.l.b16 %v41
  %v334 = vunpack.c.l.b16 %v42
  %v335 = vunpack.c.l.b16 %v43
  %v336 = vunpack.c.l.b16 %v44
  %v337 = vunpack.c.l.b16 %v45
  %v338 = vunpack.c.l.b16 %v46
  %v339 = vunpack.c.l.b16 %v47
  %v340 = vunpack.c.l.b16 %v48
  %v341 = vunpack.c.l.b16 %v49
  %v342 = vunpack.c.l.b16 %v50
  %v343 = vunpack.c.l.b16 %v51
  %v344 = vunpack.c.l.b16 %v52
  %v345 = vunpack.c.l.b16 %v53
  %v346 = vunpack.c.l.b16 %v54
  %v347 = vunpack.c.l.b16 %v55
  %v348 = vunpack.c.l.b16 %v56
  %v349 = vunpack.c.l.b16 %v57
  %v350 = vunpack.c.l.b16 %v58
  %v351 = vunpack.c.l.b16 %v59
  %v352 = vunpack.c.l.b16 %v60
  %v353 = vunpack.c.l.b16 %v61
  %v354 = vunpack.c.l.b16 %v62
  %v355 = vunpack.c.l.b16 %v63
  %v356 = vunpack.c.l.b16 %v64
  %v357 = vunpack.c.l.b16 %v65
  %v358 = vunpack.c.l.b16 %v66
  %v359 = vunpack.c.l.b16 %v67
  %v360 = vunpack.c.l.b16 %v68
  %v361 = vunpack.c.l.b16 %v69
  %v362 = vunpack.c.l.b16 %v70
  %v363 = vunpack.c.l.b16 %v71
  %v364 = vunpack.c.l.b16 %v72
  %v365 = vunpack.c.l.b16 %v73
  %v366 = vunpack.c.l.b16 %v74
  %v367 = vunpack.c.l.b16 %v75
  %v368 = vunpack.c.l.b16 %v76
  %v369 = vunpack.c.l.b16 %v77
  %v370 = vunpack.c.l.b16 %v78
  %v371 = vunpack.c.l.b16 %v79
  %v372 = vunpack.c.l.b16 %v80
  %v373 = vunpack.c.l.b16 %v81
  %v374 = vunpack.c.l.b16 %v82
  %v375 = vunpack.c.l.b16 %v83
  %v376 = vunpack.c.l.b16 %v84
  %v377 = vunpack.c.l.b16 %v85
  %v378 = vunpack.c.l.b16 %v86
  %v379 = vunpack.c.l.b16 %v87
  %v380 = vunpack.c.l.b16 %v88
  %v381 = vunpack.c.l.b16 %v89
  %v382 = vunpack.c.l.b16 %v90
  %v383 = vunpack.c.l.b16 %v91
  %v384 = vunpack.c.l.b16 %v92
  %v385 = vunpack.c.l.b16 %v93
  %v386 = vunpack.c.l.b16 %v94
  %v387 = vunpack.c.l.b16 %v95
  %v388 = vunpack.c.l.b16 %v96
  %v389 = vunpack.c.l.b16 %v97
  %v390 = vunpack.c.l.b16 %v98
  %v391 = vunpack.c.l.b16 %v99
  %v392 = vunpack.c.l.b16 %v100
  %v393 = vunpack.c.l.b16 %v101
  %v394 = vunpack.c.l.b16 %v102
  %v395 = vunpack.c.l.b16 %v103
  %v396 = vunpack.c.l.b16 %v104
  %v397 = vunpack.c.l.b16 %v105
  %v398 = vunpack.c.l.b16 %v106
  %v399 = vunpack.c.l.b16 %v107
  %v400 = vunpack.c.l.b16 %v108
  %v401 = vunpack.c.l.b16 %v109
  %v402 = vunpack.c.l.b16 %v110
  %v403 = vpack.c.b16 %v332, %v331
  %v404 = vpack.c.b16 %v334, %v333
  %v405 = vpack.c.b16 %v336, %v335
  %v406 = vpack.c.b16 %v338, %v337
  %v407 = vpack.c.b16 %v340, %v339
  %v408 = vpack.c.b16 %v342, %v341
  %v409 = vpack.c.b16 %v344, %v343
  %v410 = vpack.c.b16 %v346, %v345
  %v411 = vpack.c.b16 %v348, %v347
  %v412 = vpack.c.b16 %v350, %v349
  %v413 = vpack.c.b16 %v352, %v351
  %v414 = vpack.c.b16 %v354, %v353
  %v415 = vpack.c.b16 %v356, %v355
  %v416 = vpack.c.b16 %v358, %v357
  %v417 = vpack.c.b16 %v360, %v359
  %v418 = vpack.c.b16 %v362, %v361
  %v419 = vpack.c.b16 %v364, %v363
  %v420 = vpack.c.b16 %v366, %v365
  %v421 = vpack.c.b16 %v368, %v367
  %v422 = vpack.c.b16 %v370, %v369
  %v423 = vpack.c.b16 %v372, %v371
  %v424 = vpack.c.b16 %v374, %v373
  %v425 = vpack.c.b16 %v376, %v375
  %v426 = vpack.c.b16 %v378, %v377
  %v427 = vpack.c.b16 %v380, %v379
  %v428 = vpack.c.b16 %v382, %v381
  %v429 = vpack.c.b16 %v384, %v383
  %v430 = vpack.c.b16 %v386, %v385
  %v431 = vpack.c.b16 %v388, %v387
  %v432 = vpack.c.b16 %v390, %v389
  %v433 = vpack.c.b16 %v392, %v391
  %v434 = vpack.c.b16 %v394, %v393
  %v435 = vpack.c.b16 %v396, %v395
  %v436 = vpack.c.b16 %v398, %v397
  %v437 = vpack.c.b16 %v400, %v399
  %v438 = vpack.c.b16 %v402, %v401
  %vm475 = vcmask 523264
  %v477 = vsel %vm475, %v227, 0
  %v480 = vsel %vm475, %v232, 0
  %v483 = vsel %vm475, %v237, 0
  %v486 = vsel %vm475, %v242, 0
  %488 = vmatprep.subr.bf16.mxu0 0
  %489 = vmatpush1.bf16.msra.mxu0 %v403
  %490 = vmatprep.subr.bf16.mxu0 0
  %491 = vmatpush1.bf16.msra.mxu0 %v404
  %492 = vmatprep.subr.bf16.mxu0 0
  %493 = vmatpush1.bf16.msra.mxu0 %v405
  %494 = vmatprep.subr.bf16.mxu0 0
  %495 = vmatpush1.bf16.msra.mxu0 %v406
  %496 = vmatprep.subr.bf16.mxu0 0
  %497 = vmatpush1.bf16.msra.mxu0 %v407
  %498 = vmatprep.subr.bf16.mxu0 0
  %499 = vmatpush1.bf16.msra.mxu0 %v408
  %500 = vmatprep.subr.bf16.mxu0 0
  %501 = vmatpush1.bf16.msra.mxu0 %v409
  %502 = vmatprep.subr.bf16.mxu0 0
  %503 = vmatpush1.bf16.msra.mxu0 %v410
  %504 = vmatprep.subr.bf16.mxu0 0
  %505 = vmatpush1.bf16.msra.mxu0 %v411
  %506 = vmatprep.subr.bf16.mxu0 0
  %507 = vmatpush1.bf16.msra.mxu0 %v412
  %508 = vmatprep.subr.bf16.mxu0 0
  %509 = vmatpush1.bf16.msra.mxu0 %v413
  %510 = vmatprep.subr.bf16.mxu0 0
  %511 = vmatpush1.bf16.msra.mxu0 %v414
  %512 = vmatprep.subr.bf16.mxu0 0
  %513 = vmatpush1.bf16.msra.mxu0 %v415
  %514 = vmatprep.subr.bf16.mxu0 0
  %515 = vmatpush1.bf16.msra.mxu0 %v416
  %516 = vmatprep.subr.bf16.mxu0 0
  %517 = vmatpush1.bf16.msra.mxu0 %v417
  %518 = vmatprep.subr.bf16.mxu0 0
  %519 = vmatpush1.bf16.msra.mxu0 %v418
  %520 = vmatprep.mubr.bf16.mxu0 %v224
  %521 = vmatmul.mubr.bf16.gmra.mrb[0].mxu0 %v223
  %v522 = vpop.f32.mrb[0].mxu0
  %v523 = vadd.f32 %v122, %v522
  %v524 = vpop.f32.mrb[0].mxu0
  %v525 = vpop.f32.mrb[0].mxu0
  %v526 = vadd.f32 %v127, %v525
  %v527 = vpop.f32.mrb[0].mxu0
  %528 = vmatprep.mubr.bf16.mxu0 %v229
  %529 = vmatmul.mubr.bf16.gmra.mrb[0].mxu0 %v228
  %v530 = vpop.f32.mrb[0].mxu0
  %v531 = vadd.f32 %v132, %v530
  %v532 = vpop.f32.mrb[0].mxu0
  %v533 = vpop.f32.mrb[0].mxu0
  %v534 = vadd.f32 %v137, %v533
  %v535 = vpop.f32.mrb[0].mxu0
  %536 = vmatprep.mubr.bf16.mxu0 %v234
  %537 = vmatmul.mubr.bf16.gmra.mrb[0].mxu0 %v233
  %v538 = vpop.f32.mrb[0].mxu0
  %v539 = vadd.f32 %v142, %v538
  %v540 = vpop.f32.mrb[0].mxu0
  %v541 = vpop.f32.mrb[0].mxu0
  %v542 = vadd.f32 %v147, %v541
  %v543 = vpop.f32.mrb[0].mxu0
  %544 = vmatprep.mubr.bf16.mxu0 %v239
  %545 = vmatmul.mubr.bf16.gmra.mrb[0].mxu0 %v238
  %v546 = vpop.f32.mrb[0].mxu0
  %v547 = vadd.f32 %v152, %v546
  %v548 = vpop.f32.mrb[0].mxu0
  %v549 = vpop.f32.mrb[0].mxu0
  %v550 = vadd.f32 %v157, %v549
  %v551 = vpop.f32.mrb[0].mxu0
  %552 = vdwg.mxu0
  %553 = vmatprep.subr.bf16.mxu0 0
  %554 = vmatpush1.bf16.msra.mxu0 %v419
  %555 = vmatprep.subr.bf16.mxu0 0
  %556 = vmatpush1.bf16.msra.mxu0 %v420
  %557 = vmatprep.subr.bf16.mxu0 0
  %558 = vmatpush1.bf16.msra.mxu0 %v421
  %559 = vmatprep.subr.bf16.mxu0 0
  %560 = vmatpush1.bf16.msra.mxu0 %v422
  %561 = vmatprep.subr.bf16.mxu0 0
  %562 = vmatpush1.bf16.msra.mxu0 %v423
  %563 = vmatprep.subr.bf16.mxu0 0
  %564 = vmatpush1.bf16.msra.mxu0 %v424
  %565 = vmatprep.subr.bf16.mxu0 0
  %566 = vmatpush1.bf16.msra.mxu0 %v425
  %567 = vmatprep.subr.bf16.mxu0 0
  %568 = vmatpush1.bf16.msra.mxu0 %v426
  %569 = vmatprep.subr.bf16.mxu0 0
  %570 = vmatpush1.bf16.msra.mxu0 %v427
  %571 = vmatprep.subr.bf16.mxu0 0
  %572 = vmatpush1.bf16.msra.mxu0 %v428
  %573 = vmatprep.subr.bf16.mxu0 0
  %574 = vmatpush1.bf16.msra.mxu0 %v429
  %575 = vmatprep.subr.bf16.mxu0 0
  %576 = vmatpush1.bf16.msra.mxu0 %v430
  %577 = vmatprep.subr.bf16.mxu0 0
  %578 = vmatpush1.bf16.msra.mxu0 %v431
  %579 = vmatprep.subr.bf16.mxu0 0
  %580 = vmatpush1.bf16.msra.mxu0 %v432
  %581 = vmatprep.subr.bf16.mxu0 0
  %582 = vmatpush1.bf16.msra.mxu0 %v433
  %583 = vmatprep.subr.bf16.mxu0 0
  %584 = vmatpush1.bf16.msra.mxu0 %v434
  %585 = vmatprep.mubr.bf16.mxu0 %v226
  %586 = vmatmul.mubr.bf16.gmra.mrb[0].mxu0 %v225
  %v587 = vpop.f32.mrb[0].mxu0
  %v588 = vadd.f32 %v523, %v587
  %v589 = vpop.f32.mrb[0].mxu0
  %v590 = vpop.f32.mrb[0].mxu0
  %v591 = vadd.f32 %v526, %v590
  %v592 = vpop.f32.mrb[0].mxu0
  %593 = vmatprep.mubr.bf16.mxu0 %v231
  %594 = vmatmul.mubr.bf16.gmra.mrb[0].mxu0 %v230
  %v595 = vpop.f32.mrb[0].mxu0
  %v596 = vadd.f32 %v531, %v595
  %v597 = vpop.f32.mrb[0].mxu0
  %v598 = vpop.f32.mrb[0].mxu0
  %v599 = vadd.f32 %v534, %v598
  %v600 = vpop.f32.mrb[0].mxu0
  %601 = vmatprep.mubr.bf16.mxu0 %v236
  %602 = vmatmul.mubr.bf16.gmra.mrb[0].mxu0 %v235
  %v603 = vpop.f32.mrb[0].mxu0
  %v604 = vadd.f32 %v539, %v603
  %v605 = vpop.f32.mrb[0].mxu0
  %v606 = vpop.f32.mrb[0].mxu0
  %v607 = vadd.f32 %v542, %v606
  %v608 = vpop.f32.mrb[0].mxu0
  %609 = vmatprep.mubr.bf16.mxu0 %v241
  %610 = vmatmul.mubr.bf16.gmra.mrb[0].mxu0 %v240
  %v611 = vpop.f32.mrb[0].mxu0
  %v612 = vadd.f32 %v547, %v611
  %v613 = vpop.f32.mrb[0].mxu0
  %v614 = vpop.f32.mrb[0].mxu0
  %v615 = vadd.f32 %v550, %v614
  %v616 = vpop.f32.mrb[0].mxu0
  %617 = vdwg.mxu0
  %618 = vmatprep.subr.bf16.mxu0 0
  %619 = vmatpush1.bf16.msra.mxu0 %v435
  %620 = vmatprep.subr.bf16.mxu0 0
  %621 = vmatpush1.bf16.msra.mxu0 %v436
  %622 = vmatprep.subr.bf16.mxu0 0
  %623 = vmatpush1.bf16.msra.mxu0 %v437
  %624 = vmatprep.subr.bf16.mxu0 0
  %625 = vmatpush1.bf16.msra.mxu0 %v438
  %626 = vmatprep.subr.bf16.mxu0 0
  %627 = vmatpush1.bf16.msra.mxu0 0
  %628 = vmatprep.subr.bf16.mxu0 0
  %629 = vmatpush1.bf16.msra.mxu0 0
  %630 = vmatprep.subr.bf16.mxu0 0
  %631 = vmatpush1.bf16.msra.mxu0 0
  %632 = vmatprep.subr.bf16.mxu0 0
  %633 = vmatpush1.bf16.msra.mxu0 0
  %634 = vmatprep.subr.bf16.mxu0 0
  %635 = vmatpush1.bf16.msra.mxu0 0
  %636 = vmatprep.subr.bf16.mxu0 0
  %637 = vmatpush1.bf16.msra.mxu0 0
  %638 = vmatprep.subr.bf16.mxu0 0
  %639 = vmatpush1.bf16.msra.mxu0 0
  %640 = vmatprep.subr.bf16.mxu0 0
  %641 = vmatpush1.bf16.msra.mxu0 0
  %642 = vmatprep.subr.bf16.mxu0 0
  %643 = vmatpush1.bf16.msra.mxu0 0
  %644 = vmatprep.subr.bf16.mxu0 0
  %645 = vmatpush1.bf16.msra.mxu0 0
  %646 = vmatprep.subr.bf16.mxu0 0
  %647 = vmatpush1.bf16.msra.mxu0 0
  %648 = vmatprep.subr.bf16.mxu0 0
  %649 = vmatpush1.bf16.msra.mxu0 0
  %650 = vmatprep.mubr.bf16.mxu0 0
  %651 = vmatmul.mubr.bf16.gmra.mrb[0].mxu0 %v477
  %v652 = vpop.f32.mrb[0].mxu0
  %v653 = vadd.f32 %v588, %v652
  %v654 = vpop.f32.mrb[0].mxu0
  %v655 = vpop.f32.mrb[0].mxu0
  %v656 = vadd.f32 %v591, %v655
  %v657 = vpop.f32.mrb[0].mxu0
  %658 = vmatprep.mubr.bf16.mxu0 0
  %659 = vmatmul.mubr.bf16.gmra.mrb[0].mxu0 %v480
  %v660 = vpop.f32.mrb[0].mxu0
  %v661 = vadd.f32 %v596, %v660
  %v662 = vpop.f32.mrb[0].mxu0
  %v663 = vpop.f32.mrb[0].mxu0
  %v664 = vadd.f32 %v599, %v663
  %v665 = vpop.f32.mrb[0].mxu0
  %666 = vmatprep.mubr.bf16.mxu0 0
  %667 = vmatmul.mubr.bf16.gmra.mrb[0].mxu0 %v483
  %v668 = vpop.f32.mrb[0].mxu0
  %v669 = vadd.f32 %v604, %v668
  %v670 = vpop.f32.mrb[0].mxu0
  %v671 = vpop.f32.mrb[0].mxu0
  %v672 = vadd.f32 %v607, %v671
  %v673 = vpop.f32.mrb[0].mxu0
  %674 = vmatprep.mubr.bf16.mxu0 0
  %675 = vmatmul.mubr.bf16.gmra.mrb[0].mxu0 %v486
  %v676 = vpop.f32.mrb[0].mxu0
  %v677 = vadd.f32 %v612, %v676
  %v678 = vpop.f32.mrb[0].mxu0
  %v679 = vpop.f32.mrb[0].mxu0
  %v680 = vadd.f32 %v615, %v679
  %v681 = vpop.f32.mrb[0].mxu0
  %682 = vdwg.mxu0
  %v683 = vpack.c.bf16 %v656, %v653
  %v684 = vpack.c.bf16 %v664, %v661
  %v685 = vpack.c.bf16 %v672, %v669
  %v686 = vpack.c.bf16 %v680, %v677
  %v691 = vunpack.c.l.b16 %v683
  %v692 = vunpack.c.h.b16 %v683
  %v693 = vunpack.c.l.b16 %v684
  %v694 = vunpack.c.h.b16 %v684
  %v695 = vunpack.c.l.b16 %v685
  %v696 = vunpack.c.h.b16 %v685
  %v697 = vunpack.c.l.b16 %v686
  %v698 = vunpack.c.h.b16 %v686
  %v699 = vpack.c.b16 %v691, %v691
  %v700 = vpack.c.b16 %v692, %v692
  %v701 = vpack.c.b16 %v693, %v693
  %v702 = vpack.c.b16 %v694, %v694
  %v703 = vpack.c.b16 %v695, %v695
  %v704 = vpack.c.b16 %v696, %v696
  %v705 = vpack.c.b16 %v697, %v697
  %v706 = vpack.c.b16 %v698, %v698
  %vm715 = vcmask 11264
  %716 = vst.msk [vmem:[%s3] sm:$0xf] %vm715, %v699
  %717 = vst.msk [vmem:[%s3 + $0x4] sm:$0xf] %vm715, %v700
  %718 = vst.msk [vmem:[%s3 + $0x8] sm:$0xf] %vm715, %v701
  %719 = vst.msk [vmem:[%s3 + $0xc] sm:$0xf] %vm715, %v702
  %720 = vst.msk [vmem:[%s3 + $0x10] sm:$0xf] %vm715, %v703
  %721 = vst.msk [vmem:[%s3 + $0x14] sm:$0xf] %vm715, %v704
  %722 = vst.msk [vmem:[%s3 + $0x18] sm:$0xf] %vm715, %v705
  %723 = vst.msk [vmem:[%s3 + $0x1c] sm:$0xf] %vm715, %v706
  // Predicated region
  $region14: #{dqn_forward.6} parent=0 // pred_check
    _
  $region15: #{dqn_forward.6} parent=0 // pred_check_branch
    %725 = sbr.rel (0) target = $region17
  $region16: #{dqn_forward.6} parent=0 // pred_region
    _
  $region17: #{dqn_forward.6} parent=0 // pred_fallthru
    _
  // Predicated region
  $region18: #{dqn_forward.6} parent=0 // pred_check
    _
  $region19: #{dqn_forward.6} parent=0 // pred_check_branch
    %727 = sbr.rel (0) target = $region21
  $region20: #{dqn_forward.6} parent=0 // pred_region
    _
  $region21: #{dqn_forward.6} parent=0 // pred_fallthru
    _

</llo_original>
